<compile_context>
chip_gen: v6e
topology: v6e:2x2x1
jax: 0.10.0
libtpu: 0.0.40
codegen_flags: <defaults>
</compile_context>

<pallas_src>
import functools

import jax
import jax.numpy as jnp
from jax.experimental import pallas as pl
from jax.experimental.pallas import tpu as pltpu

# Constants from PopSAN / NoisySAN neuron models.
ENCODER_VTH = 0.999      # deterministic population spike encoder threshold
NEURON_VTH = 0.5         # CLIF firing threshold
NEURON_CDECAY = 0.5      # current decay
NEURON_VDECAY = 0.75     # voltage decay


def actor_kernel(obs_exp_ref, enc_ref, w0_ref, w1_ref, w2_ref, ilc_ref,
                 bias_ref, dec_ref, out_ref, *, spike_ts, act_limit):
    f32 = jnp.float32
    bf16 = jnp.bfloat16

    obs_exp = obs_exp_ref[...]                      # (B, n_in) f32

    # --- PopSpikeEncoderDeterministic: Gaussian receptive fields -------------
    mean = enc_ref[0:1, :]                          # (1, n_in)
    neg_half_inv_var = enc_ref[1:2, :]              # (1, n_in) = -0.5 / std^2
    diff = obs_exp - mean
    pop_act = jnp.exp(neg_half_inv_var * diff * diff)

    w0 = w0_ref[...]                                # bf16 (n_in, h0)
    w1 = w1_ref[...]                                # bf16 (h0, h1)
    w2 = w2_ref[...]                                # bf16 (h1, n_out)
    ilc = ilc_ref[...]                              # bf16 (n_out, n_out)
    bias = bias_ref[...]                            # f32  (1, h0+h1+n_out)
    dec_wb = dec_ref[...]                           # f32  (n_out+1, a_dim)

    B = obs_exp.shape[0]
    n_in = obs_exp.shape[1]
    h0 = w0.shape[1]
    h1 = w1.shape[1]
    n_out = w2.shape[1]

    # --- Hoisted encoder spike train + layer-0 matmul ------------------------
    # The encoder's regular-spike IF (soft reset) depends only on pop_act, so
    # all spike_ts frames are produced before the network loop (VPU only),
    # then fed through a single (spike_ts*B, n_in) @ (n_in, h0) bf16 matmul.
    enc_v = jnp.zeros((B, n_in), f32)
    spk_steps = []
    for _ in range(spike_ts):
        enc_v = enc_v + pop_act
        spk_f = (enc_v > ENCODER_VTH).astype(f32)
        spk_steps.append(spk_f)
        enc_v = enc_v - spk_f * ENCODER_VTH
    spk_all = jnp.concatenate(spk_steps, axis=0).astype(bf16)   # (T*B, n_in)
    x0_all = jnp.dot(spk_all, w0, preferred_element_type=f32)   # (T*B, h0)
    x0_all = x0_all + jnp.broadcast_to(bias[:, :h0], (spike_ts * B, h0))

    # Hoisted bias broadcasts (JAX does not CSE broadcast_in_dim in the loop).
    b1 = jnp.broadcast_to(bias[:, h0:h0 + h1], (B, h1))
    b2 = jnp.broadcast_to(bias[:, h0 + h1:], (B, n_out))

    zeros = lambda n: jnp.zeros((B, n), f32)
    falses = lambda n: jnp.zeros((B, n), jnp.bool_)
    c0, v0, f0 = zeros(h0), zeros(h0), falses(h0)      # NoisyCLIF layer 0
    c1, v1, f1 = zeros(h1), zeros(h1), falses(h1)      # NoisyCLIF layer 1
    c2, v2, f2 = zeros(n_out), zeros(n_out), falses(n_out)  # NoisyILCCLIF
    s2_bf = jnp.zeros((B, n_out), bf16)                 # prev-step output spikes
    s2_sum = zeros(n_out)                               # decoder spike sum

    # Static Python loop: small fixed trip count, static slices of x0_all,
    # tiny live state -> no spill concern at these shapes.
    for t in range(spike_ts):
        # ILC contribution depends only on the previous step's spikes, so it
        # overlaps the layer-0/1 dependency chain.
        ilc_x = jnp.dot(s2_bf, ilc, preferred_element_type=f32)

        # Hidden layer 0: NoisyCLIFNode (noise off); x0 precomputed above.
        x0 = x0_all[t * B:(t + 1) * B, :]
        c0 = NEURON_CDECAY * c0 + x0
        v0 = jnp.where(f0, c0, NEURON_VDECAY * v0 + c0)   # == vdecay*v*(1-s)+c
        f0 = v0 > NEURON_VTH
        s0_bf = f0.astype(bf16)

        # Hidden layer 1: Linear + NoisyCLIFNode (noise off).
        x1 = jnp.dot(s0_bf, w1, preferred_element_type=f32) + b1
        c1 = NEURON_CDECAY * c1 + x1
        v1 = jnp.where(f1, c1, NEURON_VDECAY * v1 + c1)
        f1 = v1 > NEURON_VTH
        s1_bf = f1.astype(bf16)

        # Output layer: Linear + intra-layer connection (prev-step spikes).
        x2 = jnp.dot(s1_bf, w2, preferred_element_type=f32) + ilc_x + b2
        c2 = NEURON_CDECAY * c2 + x2
        v2 = jnp.where(f2, c2, NEURON_VDECAY * v2 + c2)
        f2 = v2 > NEURON_VTH
        s2_bf = f2.astype(bf16)

        # Decoder is linear in s2 -> just accumulate spikes inside the loop.
        s2_sum = s2_sum + f2.astype(f32)

    # Hoisted decoder: grouped Conv1d applied each step + last-mem IF decode
    #   == one matmul on the spike sum + spike_ts copies of the conv bias.
    dec_w = dec_wb[:n_out, :]                       # (n_out, a_dim)
    dec_b = dec_wb[n_out:, :]                       # (1, a_dim)
    dec_v = (jnp.dot(s2_sum, dec_w, preferred_element_type=f32)
             + jnp.float32(spike_ts) * dec_b)
    out_ref[...] = (act_limit * jnp.tanh(dec_v)).astype(out_ref.dtype)


def noisy_pop_spike_actor(obs, fused, *, enc_pop_dim, spike_ts, act_limit,
                          batch_tile=None):
    """batch_tile: None -> single grid step (best on single-TC v5e/v6e).
    On v7x with B >= 16, pass batch_tile = B // 2 (multiple of 8) so the
    'parallel' batch axis spans both TensorCores."""
    B = obs.shape[0]
    # Pure layout op (host/XLA): expand obs to the population layout.
    obs_exp = jnp.repeat(obs, enc_pop_dim, axis=1).astype(jnp.float32)
    n_in = obs_exp.shape[1]
    h0 = fused["w0"].shape[1]
    h1 = fused["w1"].shape[1]
    n_out = fused["w2"].shape[1]
    a_dim = fused["dec_wb"].shape[1]

    bt = B if batch_tile is None else batch_tile
    if bt != B:
        assert B % bt == 0 and bt % 8 == 0, \
            "batch tile must divide B and be a multiple of 8"
    grid = (B // bt,)

    params = [fused["enc"], fused["w0"], fused["w1"], fused["w2"],
              fused["ilc"], fused["bias"], fused["dec_wb"]]
    param_spec = lambda a: pl.BlockSpec(a.shape, lambda i: (0, 0))

    # Advisory cost estimate: tiny, latency-bound custom call.
    flops = int(2 * B * spike_ts * (n_in * h0 + h0 * h1 + h1 * n_out
                                    + n_out * n_out)
                + 2 * B * n_out * a_dim)
    transcendentals = int(B * (n_in + a_dim))
    bytes_accessed = int(obs_exp.size * 4 + B * a_dim * 4
                         + sum(int(p.size) * p.dtype.itemsize for p in params))

    kernel = functools.partial(actor_kernel, spike_ts=spike_ts,
                               act_limit=act_limit)

    return pl.pallas_call(
        kernel,
        out_shape=jax.ShapeDtypeStruct((B, a_dim), jnp.float32),
        grid=grid,
        in_specs=[pl.BlockSpec((bt, n_in), lambda i: (i, 0))]
                 + [param_spec(a) for a in params],
        out_specs=pl.BlockSpec((bt, a_dim), lambda i: (i, 0)),
        compiler_params=pltpu.CompilerParams(
            dimension_semantics=("parallel",)),   # batch axis megacore-shardable
        cost_estimate=pl.CostEstimate(flops=flops,
                                      transcendentals=transcendentals,
                                      bytes_accessed=bytes_accessed),
    )(obs_exp, *params)


def make_raw_params(key, obs_dim, act_dim, enc_pop_dim, dec_pop_dim,
                    hidden_sizes, mean_range, std):
    """Deterministic synthetic parameters matching the module's shapes."""
    in_pop_dim = obs_dim * enc_pop_dim
    out_pop_dim = act_dim * dec_pop_dim
    h0, h1 = hidden_sizes
    ks = jax.random.split(key, 8)

    def lin(k, fan_in, fan_out):
        scale = 1.0 / jnp.sqrt(jnp.float32(fan_in))
        kw, kb = jax.random.split(k)
        w = jax.random.uniform(kw, (fan_in, fan_out), jnp.float32, -scale, scale)
        b = jax.random.uniform(kb, (1, fan_out), jnp.float32, -scale, scale)
        return w, b

    w0, b0 = lin(ks[0], in_pop_dim, h0)
    w1, b1 = lin(ks[1], h0, h1)
    w2, b2 = lin(ks[2], h1, out_pop_dim)

    # Intra-layer connection (NoisyILCCLIFNode): per action dim a (P,P) mixing
    # matrix on previous-step spikes -> block-diagonal (A*P, A*P).
    ilc_blocks = jax.random.uniform(
        ks[3], (act_dim, dec_pop_dim, dec_pop_dim), jnp.float32,
        -1.0 / dec_pop_dim, 1.0 / dec_pop_dim)
    ilc = jnp.zeros((out_pop_dim, out_pop_dim), jnp.float32)
    for a in range(act_dim):
        ilc = ilc.at[a * dec_pop_dim:(a + 1) * dec_pop_dim,
                     a * dec_pop_dim:(a + 1) * dec_pop_dim].set(ilc_blocks[a])

    # Decoder group_fc: Conv1d(act_dim, act_dim, pop_dim, groups=act_dim)
    # weight (A, 1, P) + bias (A,) -> block-structured (A*P, A) matrix.
    scale = 1.0 / jnp.sqrt(jnp.float32(dec_pop_dim))
    gc_w = jax.random.uniform(ks[4], (act_dim, dec_pop_dim), jnp.float32,
                              -scale, scale)
    gc_b = jax.random.uniform(ks[5], (1, act_dim), jnp.float32, -scale, scale)
    dec_w = jnp.zeros((out_pop_dim, act_dim), jnp.float32)
    for a in range(act_dim):
        dec_w = dec_w.at[a * dec_pop_dim:(a + 1) * dec_pop_dim, a].set(gc_w[a])

    # Encoder Gaussian receptive fields: evenly spaced means, constant std.
    delta = (mean_range[1] - mean_range[0]) / (enc_pop_dim - 1)
    mean_grid = mean_range[0] + delta * jnp.arange(enc_pop_dim, dtype=jnp.float32)
    mean = jnp.tile(mean_grid, (obs_dim,)).reshape(1, in_pop_dim)
    std_flat = jnp.full((1, in_pop_dim), std, jnp.float32)

    return dict(mean=mean, std=std_flat,
                w0=w0, b0=b0, w1=w1, b1=b1, w2=w2, b2=b2,
                ilc=ilc, dec_w=dec_w, dec_b=gc_b)


def fuse_params(raw):
    """Host-side packing / fusion of parameters for the kernel."""
    mean, std = raw["mean"], raw["std"]
    enc = jnp.concatenate([mean, -0.5 / (std * std)], axis=0)          # (2, n_in)
    w0 = raw["w0"].astype(jnp.bfloat16)
    w1 = raw["w1"].astype(jnp.bfloat16)
    w2 = raw["w2"].astype(jnp.bfloat16)
    ilc = raw["ilc"].astype(jnp.bfloat16)
    bias = jnp.concatenate([raw["b0"], raw["b1"], raw["b2"]], axis=1)  # (1, h0+h1+n_out)
    dec_wb = jnp.concatenate([raw["dec_w"], raw["dec_b"]], axis=0)     # (n_out+1, a_dim)
    return dict(enc=enc, w0=w0, w1=w1, w2=w2, ilc=ilc, bias=bias, dec_wb=dec_wb)


def reference_forward(obs, raw, *, enc_pop_dim, spike_ts, act_limit):
    """Pure-JAX reference (timestep-major, unfused), using the same
    bf16-rounded weights as the kernel for apples-to-apples comparison."""
    f32 = jnp.float32
    rnd = lambda name: raw[name].astype(jnp.bfloat16).astype(f32)
    w0, w1, w2, ilc = rnd("w0"), rnd("w1"), rnd("w2"), rnd("ilc")
    b0, b1, b2 = raw["b0"], raw["b1"], raw["b2"]
    dec_w, dec_b = raw["dec_w"], raw["dec_b"]
    mean, std = raw["mean"], raw["std"]

    obs_exp = jnp.repeat(obs, enc_pop_dim, axis=1).astype(f32)
    nhi = -0.5 / (std * std)
    diff = obs_exp - mean
    pop_act = jnp.exp(nhi * diff * diff)

    B = obs.shape[0]
    n_in, h0, h1 = pop_act.shape[1], w0.shape[1], w1.shape[1]
    n_out, a_dim = w2.shape[1], dec_w.shape[1]
    z = lambda n: jnp.zeros((B, n), f32)
    enc_v = z(n_in)
    c0, v0, s0 = z(h0), z(h0), z(h0)
    c1, v1, s1 = z(h1), z(h1), z(h1)
    c2, v2, s2 = z(n_out), z(n_out), z(n_out)
    dec_v = z(a_dim)

    for _ in range(spike_ts):
        enc_v = enc_v + pop_act
        spk = (enc_v > ENCODER_VTH).astype(f32)
        enc_v = enc_v - spk * ENCODER_VTH

        x0 = spk @ w0 + b0
        c0 = NEURON_CDECAY * c0 + x0
        v0 = NEURON_VDECAY * v0 * (1.0 - s0) + c0
        s0 = (v0 > NEURON_VTH).astype(f32)

        x1 = s0 @ w1 + b1
        c1 = NEURON_CDECAY * c1 + x1
        v1 = NEURON_VDECAY * v1 * (1.0 - s1) + c1
        s1 = (v1 > NEURON_VTH).astype(f32)

        x2 = s1 @ w2 + b2 + s2 @ ilc
        c2 = NEURON_CDECAY * c2 + x2
        v2 = NEURON_VDECAY * v2 * (1.0 - s2) + c2
        s2 = (v2 > NEURON_VTH).astype(f32)

        dec_v = dec_v + (s2 @ dec_w + dec_b)

    return act_limit * jnp.tanh(dec_v)


if __name__ == "__main__":
    # Small, module-consistent shapes.
    obs_dim = 8
    act_dim = 4
    enc_pop_dim = 4
    dec_pop_dim = 4
    hidden_sizes = (32, 32)
    mean_range = (-3.0, 3.0)
    std = 0.15
    spike_ts = 8
    act_limit = 1.0
    batch = 8

    key = jax.random.PRNGKey(0)
    k_obs, k_params = jax.random.split(key)
    obs = jax.random.normal(k_obs, (batch, obs_dim), jnp.float32)
    raw = make_raw_params(k_params, obs_dim, act_dim, enc_pop_dim, dec_pop_dim,
                          hidden_sizes, mean_range, std)
    fused = fuse_params(raw)

    action = noisy_pop_spike_actor(obs, fused, enc_pop_dim=enc_pop_dim,
                                   spike_ts=spike_ts, act_limit=act_limit)
    action = jax.block_until_ready(action)

    ref = reference_forward(obs, raw, enc_pop_dim=enc_pop_dim,
                            spike_ts=spike_ts, act_limit=act_limit)

    assert action.shape == (batch, act_dim)
    assert bool(jnp.all(jnp.isfinite(action)))
    assert bool(jnp.all(jnp.abs(action) <= act_limit + 1e-6))
    assert bool(jnp.allclose(action, ref, atol=1e-3, rtol=0.0)), \
        f"max diff {float(jnp.max(jnp.abs(action - ref)))}"
    print("KERNEL_OK")
</pallas_src>

<mosaic_0001>
module attributes {stable_mosaic.version = 11 : i64} {
  func.func @actor_kernel(%arg0: i32, %arg1: memref<8x32xf32, #tpu.memory_space<vmem>>, %arg2: memref<2x32xf32, #tpu.memory_space<vmem>>, %arg3: memref<32x32xbf16, #tpu.memory_space<vmem>>, %arg4: memref<32x32xbf16, #tpu.memory_space<vmem>>, %arg5: memref<32x16xbf16, #tpu.memory_space<vmem>>, %arg6: memref<16x16xbf16, #tpu.memory_space<vmem>>, %arg7: memref<1x80xf32, #tpu.memory_space<vmem>>, %arg8: memref<17x4xf32, #tpu.memory_space<vmem>>, %arg9: memref<8x4xf32, #tpu.memory_space<vmem>>) attributes {dimension_semantics = [#tpu.dimension_semantics<parallel>], iteration_bounds = array<i64: 1>, scalar_prefetch = 0 : i64, scratch_operands = 0 : i64, tpu.core_type = #tpu.core_type<tc>, window_params = [{transform_indices = @transform_0, window_bounds = array<i64: 8, 32>}, {pipeline_mode = #tpu.pipeline_mode<synchronous>, transform_indices = @transform_1, window_bounds = array<i64: 2, 32>}, {pipeline_mode = #tpu.pipeline_mode<synchronous>, transform_indices = @transform_2, window_bounds = array<i64: 32, 32>}, {pipeline_mode = #tpu.pipeline_mode<synchronous>, transform_indices = @transform_3, window_bounds = array<i64: 32, 32>}, {pipeline_mode = #tpu.pipeline_mode<synchronous>, transform_indices = @transform_4, window_bounds = array<i64: 32, 16>}, {pipeline_mode = #tpu.pipeline_mode<synchronous>, transform_indices = @transform_5, window_bounds = array<i64: 16, 16>}, {pipeline_mode = #tpu.pipeline_mode<synchronous>, transform_indices = @transform_6, window_bounds = array<i64: 1, 80>}, {pipeline_mode = #tpu.pipeline_mode<synchronous>, transform_indices = @transform_7, window_bounds = array<i64: 17, 4>}, {transform_indices = @transform_8, window_bounds = array<i64: 8, 4>}]} {
    %c0 = arith.constant 0 : index
    %c0_0 = arith.constant 0 : index
    %0 = vector.load %arg1[%c0, %c0_0] : memref<8x32xf32, #tpu.memory_space<vmem>>, vector<8x32xf32>
    %c0_1 = arith.constant 0 : index
    %c0_2 = arith.constant 0 : index
    %1 = vector.load %arg2[%c0_1, %c0_2] : memref<2x32xf32, #tpu.memory_space<vmem>>, vector<1x32xf32>
    %c1 = arith.constant 1 : index
    %c0_3 = arith.constant 0 : index
    %2 = vector.load %arg2[%c1, %c0_3] : memref<2x32xf32, #tpu.memory_space<vmem>>, vector<1x32xf32>
    %3 = vector.broadcast %1 : vector<1x32xf32> to vector<8x32xf32>
    %4 = arith.subf %0, %3 : vector<8x32xf32>
    %5 = vector.broadcast %2 : vector<1x32xf32> to vector<8x32xf32>
    %6 = arith.mulf %5, %4 : vector<8x32xf32>
    %7 = arith.mulf %6, %4 : vector<8x32xf32>
    %8 = math.exp %7 : vector<8x32xf32>
    %c0_4 = arith.constant 0 : index
    %c0_5 = arith.constant 0 : index
    %9 = vector.load %arg3[%c0_4, %c0_5] : memref<32x32xbf16, #tpu.memory_space<vmem>>, vector<32x32xbf16>
    %c0_6 = arith.constant 0 : index
    %c0_7 = arith.constant 0 : index
    %10 = vector.load %arg4[%c0_6, %c0_7] : memref<32x32xbf16, #tpu.memory_space<vmem>>, vector<32x32xbf16>
    %c0_8 = arith.constant 0 : index
    %c0_9 = arith.constant 0 : index
    %11 = vector.load %arg5[%c0_8, %c0_9] : memref<32x16xbf16, #tpu.memory_space<vmem>>, vector<32x16xbf16>
    %c0_10 = arith.constant 0 : index
    %c0_11 = arith.constant 0 : index
    %12 = vector.load %arg6[%c0_10, %c0_11] : memref<16x16xbf16, #tpu.memory_space<vmem>>, vector<16x16xbf16>
    %c0_12 = arith.constant 0 : index
    %c0_13 = arith.constant 0 : index
    %13 = vector.load %arg7[%c0_12, %c0_13] : memref<1x80xf32, #tpu.memory_space<vmem>>, vector<1x80xf32>
    %c0_14 = arith.constant 0 : index
    %c0_15 = arith.constant 0 : index
    %14 = vector.load %arg8[%c0_14, %c0_15] : memref<17x4xf32, #tpu.memory_space<vmem>>, vector<17x4xf32>
    %cst = arith.constant 0.000000e+00 : f32
    %15 = vector.broadcast %cst : f32 to vector<8x32xf32>
    %16 = arith.addf %15, %8 : vector<8x32xf32>
    %cst_16 = arith.constant 9.990000e-01 : f32
    %17 = vector.broadcast %cst_16 : f32 to vector<8x32xf32>
    %18 = arith.cmpf ogt, %16, %17 : vector<8x32xf32>
    %19 = arith.extui %18 : vector<8x32xi1> to vector<8x32xi32>
    %20 = arith.sitofp %19 : vector<8x32xi32> to vector<8x32xf32>
    %cst_17 = arith.constant 9.990000e-01 : f32
    %21 = vector.broadcast %cst_17 : f32 to vector<8x32xf32>
    %22 = arith.mulf %20, %21 : vector<8x32xf32>
    %23 = arith.subf %16, %22 : vector<8x32xf32>
    %24 = arith.addf %23, %8 : vector<8x32xf32>
    %cst_18 = arith.constant 9.990000e-01 : f32
    %25 = vector.broadcast %cst_18 : f32 to vector<8x32xf32>
    %26 = arith.cmpf ogt, %24, %25 : vector<8x32xf32>
    %27 = arith.extui %26 : vector<8x32xi1> to vector<8x32xi32>
    %28 = arith.sitofp %27 : vector<8x32xi32> to vector<8x32xf32>
    %cst_19 = arith.constant 9.990000e-01 : f32
    %29 = vector.broadcast %cst_19 : f32 to vector<8x32xf32>
    %30 = arith.mulf %28, %29 : vector<8x32xf32>
    %31 = arith.subf %24, %30 : vector<8x32xf32>
    %32 = arith.addf %31, %8 : vector<8x32xf32>
    %cst_20 = arith.constant 9.990000e-01 : f32
    %33 = vector.broadcast %cst_20 : f32 to vector<8x32xf32>
    %34 = arith.cmpf ogt, %32, %33 : vector<8x32xf32>
    %35 = arith.extui %34 : vector<8x32xi1> to vector<8x32xi32>
    %36 = arith.sitofp %35 : vector<8x32xi32> to vector<8x32xf32>
    %cst_21 = arith.constant 9.990000e-01 : f32
    %37 = vector.broadcast %cst_21 : f32 to vector<8x32xf32>
    %38 = arith.mulf %36, %37 : vector<8x32xf32>
    %39 = arith.subf %32, %38 : vector<8x32xf32>
    %40 = arith.addf %39, %8 : vector<8x32xf32>
    %cst_22 = arith.constant 9.990000e-01 : f32
    %41 = vector.broadcast %cst_22 : f32 to vector<8x32xf32>
    %42 = arith.cmpf ogt, %40, %41 : vector<8x32xf32>
    %43 = arith.extui %42 : vector<8x32xi1> to vector<8x32xi32>
    %44 = arith.sitofp %43 : vector<8x32xi32> to vector<8x32xf32>
    %cst_23 = arith.constant 9.990000e-01 : f32
    %45 = vector.broadcast %cst_23 : f32 to vector<8x32xf32>
    %46 = arith.mulf %44, %45 : vector<8x32xf32>
    %47 = arith.subf %40, %46 : vector<8x32xf32>
    %48 = arith.addf %47, %8 : vector<8x32xf32>
    %cst_24 = arith.constant 9.990000e-01 : f32
    %49 = vector.broadcast %cst_24 : f32 to vector<8x32xf32>
    %50 = arith.cmpf ogt, %48, %49 : vector<8x32xf32>
    %51 = arith.extui %50 : vector<8x32xi1> to vector<8x32xi32>
    %52 = arith.sitofp %51 : vector<8x32xi32> to vector<8x32xf32>
    %cst_25 = arith.constant 9.990000e-01 : f32
    %53 = vector.broadcast %cst_25 : f32 to vector<8x32xf32>
    %54 = arith.mulf %52, %53 : vector<8x32xf32>
    %55 = arith.subf %48, %54 : vector<8x32xf32>
    %56 = arith.addf %55, %8 : vector<8x32xf32>
    %cst_26 = arith.constant 9.990000e-01 : f32
    %57 = vector.broadcast %cst_26 : f32 to vector<8x32xf32>
    %58 = arith.cmpf ogt, %56, %57 : vector<8x32xf32>
    %59 = arith.extui %58 : vector<8x32xi1> to vector<8x32xi32>
    %60 = arith.sitofp %59 : vector<8x32xi32> to vector<8x32xf32>
    %cst_27 = arith.constant 9.990000e-01 : f32
    %61 = vector.broadcast %cst_27 : f32 to vector<8x32xf32>
    %62 = arith.mulf %60, %61 : vector<8x32xf32>
    %63 = arith.subf %56, %62 : vector<8x32xf32>
    %64 = arith.addf %63, %8 : vector<8x32xf32>
    %cst_28 = arith.constant 9.990000e-01 : f32
    %65 = vector.broadcast %cst_28 : f32 to vector<8x32xf32>
    %66 = arith.cmpf ogt, %64, %65 : vector<8x32xf32>
    %67 = arith.extui %66 : vector<8x32xi1> to vector<8x32xi32>
    %68 = arith.sitofp %67 : vector<8x32xi32> to vector<8x32xf32>
    %cst_29 = arith.constant 9.990000e-01 : f32
    %69 = vector.broadcast %cst_29 : f32 to vector<8x32xf32>
    %70 = arith.mulf %68, %69 : vector<8x32xf32>
    %71 = arith.subf %64, %70 : vector<8x32xf32>
    %72 = arith.addf %71, %8 : vector<8x32xf32>
    %cst_30 = arith.constant 9.990000e-01 : f32
    %73 = vector.broadcast %cst_30 : f32 to vector<8x32xf32>
    %74 = arith.cmpf ogt, %72, %73 : vector<8x32xf32>
    %75 = arith.extui %74 : vector<8x32xi1> to vector<8x32xi32>
    %76 = arith.sitofp %75 : vector<8x32xi32> to vector<8x32xf32>
    %77 = tpu.concatenate %20, %28, %36, %44, %52, %60, %68, %76 in 0 : vector<8x32xf32>, vector<8x32xf32>, vector<8x32xf32>, vector<8x32xf32>, vector<8x32xf32>, vector<8x32xf32>, vector<8x32xf32>, vector<8x32xf32> -> vector<64x32xf32>
    %78 = arith.truncf %77 : vector<64x32xf32> to vector<64x32xbf16>
    %cst_31 = arith.constant dense<0.000000e+00> : vector<64x32xf32>
    %79 = tpu.matmul %78, %9, %cst_31 {dimension_numbers = #tpu.dot_dimension_numbers<[1], [0], [0], [1], [0, 0, 1, 1], [], []>} : vector<64x32xbf16>, vector<32x32xbf16>, vector<64x32xf32> -> vector<64x32xf32>
    %80 = vector.extract_strided_slice %13 {offsets = [0, 0], sizes = [1, 32], strides = [1, 1]} : vector<1x80xf32> to vector<1x32xf32>
    %81 = vector.shape_cast %80 : vector<1x32xf32> to vector<1x32xf32>
    %82 = vector.broadcast %81 : vector<1x32xf32> to vector<64x32xf32>
    %83 = arith.addf %79, %82 : vector<64x32xf32>
    %84 = vector.extract_strided_slice %13 {offsets = [0, 32], sizes = [1, 32], strides = [1, 1]} : vector<1x80xf32> to vector<1x32xf32>
    %85 = vector.shape_cast %84 : vector<1x32xf32> to vector<1x32xf32>
    %86 = vector.broadcast %85 : vector<1x32xf32> to vector<8x32xf32>
    %87 = vector.extract_strided_slice %13 {offsets = [0, 64], sizes = [1, 16], strides = [1, 1]} : vector<1x80xf32> to vector<1x16xf32>
    %88 = vector.shape_cast %87 : vector<1x16xf32> to vector<1x16xf32>
    %89 = vector.broadcast %88 : vector<1x16xf32> to vector<8x16xf32>
    %cst_32 = arith.constant 0.000000e+00 : f32
    %90 = vector.broadcast %cst_32 : f32 to vector<8x32xf32>
    %cst_33 = arith.constant 0.000000e+00 : f32
    %91 = vector.broadcast %cst_33 : f32 to vector<8x32xf32>
    %false = arith.constant false
    %92 = vector.broadcast %false : i1 to vector<8x32xi1>
    %cst_34 = arith.constant 0.000000e+00 : f32
    %93 = vector.broadcast %cst_34 : f32 to vector<8x32xf32>
    %cst_35 = arith.constant 0.000000e+00 : f32
    %94 = vector.broadcast %cst_35 : f32 to vector<8x32xf32>
    %false_36 = arith.constant false
    %95 = vector.broadcast %false_36 : i1 to vector<8x32xi1>
    %cst_37 = arith.constant 0.000000e+00 : f32
    %96 = vector.broadcast %cst_37 : f32 to vector<8x16xf32>
    %cst_38 = arith.constant 0.000000e+00 : f32
    %97 = vector.broadcast %cst_38 : f32 to vector<8x16xf32>
    %false_39 = arith.constant false
    %98 = vector.broadcast %false_39 : i1 to vector<8x16xi1>
    %cst_40 = arith.constant 0.000000e+00 : bf16
    %99 = vector.broadcast %cst_40 : bf16 to vector<8x16xbf16>
    %cst_41 = arith.constant 0.000000e+00 : f32
    %100 = vector.broadcast %cst_41 : f32 to vector<8x16xf32>
    %cst_42 = arith.constant dense<0.000000e+00> : vector<8x16xf32>
    %101 = tpu.matmul %99, %12, %cst_42 {dimension_numbers = #tpu.dot_dimension_numbers<[1], [0], [0], [1], [0, 0, 1, 1], [], []>} : vector<8x16xbf16>, vector<16x16xbf16>, vector<8x16xf32> -> vector<8x16xf32>
    %102 = vector.extract_strided_slice %83 {offsets = [0, 0], sizes = [8, 32], strides = [1, 1]} : vector<64x32xf32> to vector<8x32xf32>
    %cst_43 = arith.constant 5.000000e-01 : f32
    %103 = vector.broadcast %cst_43 : f32 to vector<8x32xf32>
    %104 = arith.mulf %103, %90 : vector<8x32xf32>
    %105 = arith.addf %104, %102 : vector<8x32xf32>
    %cst_44 = arith.constant 7.500000e-01 : f32
    %106 = vector.broadcast %cst_44 : f32 to vector<8x32xf32>
    %107 = arith.mulf %106, %91 : vector<8x32xf32>
    %108 = arith.addf %107, %105 : vector<8x32xf32>
    %109 = arith.select %92, %105, %108 : vector<8x32xi1>, vector<8x32xf32>
    %cst_45 = arith.constant 5.000000e-01 : f32
    %110 = vector.broadcast %cst_45 : f32 to vector<8x32xf32>
    %111 = arith.cmpf ogt, %109, %110 : vector<8x32xf32>
    %112 = arith.extui %111 : vector<8x32xi1> to vector<8x32xi32>
    %113 = arith.sitofp %112 : vector<8x32xi32> to vector<8x32xf32>
    %114 = arith.truncf %113 : vector<8x32xf32> to vector<8x32xbf16>
    %cst_46 = arith.constant dense<0.000000e+00> : vector<8x32xf32>
    %115 = tpu.matmul %114, %10, %cst_46 {dimension_numbers = #tpu.dot_dimension_numbers<[1], [0], [0], [1], [0, 0, 1, 1], [], []>} : vector<8x32xbf16>, vector<32x32xbf16>, vector<8x32xf32> -> vector<8x32xf32>
    %116 = arith.addf %115, %86 : vector<8x32xf32>
    %cst_47 = arith.constant 5.000000e-01 : f32
    %117 = vector.broadcast %cst_47 : f32 to vector<8x32xf32>
    %118 = arith.mulf %117, %93 : vector<8x32xf32>
    %119 = arith.addf %118, %116 : vector<8x32xf32>
    %cst_48 = arith.constant 7.500000e-01 : f32
    %120 = vector.broadcast %cst_48 : f32 to vector<8x32xf32>
    %121 = arith.mulf %120, %94 : vector<8x32xf32>
    %122 = arith.addf %121, %119 : vector<8x32xf32>
    %123 = arith.select %95, %119, %122 : vector<8x32xi1>, vector<8x32xf32>
    %cst_49 = arith.constant 5.000000e-01 : f32
    %124 = vector.broadcast %cst_49 : f32 to vector<8x32xf32>
    %125 = arith.cmpf ogt, %123, %124 : vector<8x32xf32>
    %126 = arith.extui %125 : vector<8x32xi1> to vector<8x32xi32>
    %127 = arith.sitofp %126 : vector<8x32xi32> to vector<8x32xf32>
    %128 = arith.truncf %127 : vector<8x32xf32> to vector<8x32xbf16>
    %cst_50 = arith.constant dense<0.000000e+00> : vector<8x16xf32>
    %129 = tpu.matmul %128, %11, %cst_50 {dimension_numbers = #tpu.dot_dimension_numbers<[1], [0], [0], [1], [0, 0, 1, 1], [], []>} : vector<8x32xbf16>, vector<32x16xbf16>, vector<8x16xf32> -> vector<8x16xf32>
    %130 = arith.addf %129, %101 : vector<8x16xf32>
    %131 = arith.addf %130, %89 : vector<8x16xf32>
    %cst_51 = arith.constant 5.000000e-01 : f32
    %132 = vector.broadcast %cst_51 : f32 to vector<8x16xf32>
    %133 = arith.mulf %132, %96 : vector<8x16xf32>
    %134 = arith.addf %133, %131 : vector<8x16xf32>
    %cst_52 = arith.constant 7.500000e-01 : f32
    %135 = vector.broadcast %cst_52 : f32 to vector<8x16xf32>
    %136 = arith.mulf %135, %97 : vector<8x16xf32>
    %137 = arith.addf %136, %134 : vector<8x16xf32>
    %138 = arith.select %98, %134, %137 : vector<8x16xi1>, vector<8x16xf32>
    %cst_53 = arith.constant 5.000000e-01 : f32
    %139 = vector.broadcast %cst_53 : f32 to vector<8x16xf32>
    %140 = arith.cmpf ogt, %138, %139 : vector<8x16xf32>
    %141 = arith.extui %140 : vector<8x16xi1> to vector<8x16xi32>
    %142 = arith.sitofp %141 : vector<8x16xi32> to vector<8x16xf32>
    %143 = arith.truncf %142 : vector<8x16xf32> to vector<8x16xbf16>
    %144 = arith.extui %140 : vector<8x16xi1> to vector<8x16xi32>
    %145 = arith.sitofp %144 : vector<8x16xi32> to vector<8x16xf32>
    %146 = arith.addf %100, %145 : vector<8x16xf32>
    %cst_54 = arith.constant dense<0.000000e+00> : vector<8x16xf32>
    %147 = tpu.matmul %143, %12, %cst_54 {dimension_numbers = #tpu.dot_dimension_numbers<[1], [0], [0], [1], [0, 0, 1, 1], [], []>} : vector<8x16xbf16>, vector<16x16xbf16>, vector<8x16xf32> -> vector<8x16xf32>
    %148 = vector.extract_strided_slice %83 {offsets = [8, 0], sizes = [8, 32], strides = [1, 1]} : vector<64x32xf32> to vector<8x32xf32>
    %cst_55 = arith.constant 5.000000e-01 : f32
    %149 = vector.broadcast %cst_55 : f32 to vector<8x32xf32>
    %150 = arith.mulf %149, %105 : vector<8x32xf32>
    %151 = arith.addf %150, %148 : vector<8x32xf32>
    %cst_56 = arith.constant 7.500000e-01 : f32
    %152 = vector.broadcast %cst_56 : f32 to vector<8x32xf32>
    %153 = arith.mulf %152, %109 : vector<8x32xf32>
    %154 = arith.addf %153, %151 : vector<8x32xf32>
    %155 = arith.select %111, %151, %154 : vector<8x32xi1>, vector<8x32xf32>
    %cst_57 = arith.constant 5.000000e-01 : f32
    %156 = vector.broadcast %cst_57 : f32 to vector<8x32xf32>
    %157 = arith.cmpf ogt, %155, %156 : vector<8x32xf32>
    %158 = arith.extui %157 : vector<8x32xi1> to vector<8x32xi32>
    %159 = arith.sitofp %158 : vector<8x32xi32> to vector<8x32xf32>
    %160 = arith.truncf %159 : vector<8x32xf32> to vector<8x32xbf16>
    %cst_58 = arith.constant dense<0.000000e+00> : vector<8x32xf32>
    %161 = tpu.matmul %160, %10, %cst_58 {dimension_numbers = #tpu.dot_dimension_numbers<[1], [0], [0], [1], [0, 0, 1, 1], [], []>} : vector<8x32xbf16>, vector<32x32xbf16>, vector<8x32xf32> -> vector<8x32xf32>
    %162 = arith.addf %161, %86 : vector<8x32xf32>
    %cst_59 = arith.constant 5.000000e-01 : f32
    %163 = vector.broadcast %cst_59 : f32 to vector<8x32xf32>
    %164 = arith.mulf %163, %119 : vector<8x32xf32>
    %165 = arith.addf %164, %162 : vector<8x32xf32>
    %cst_60 = arith.constant 7.500000e-01 : f32
    %166 = vector.broadcast %cst_60 : f32 to vector<8x32xf32>
    %167 = arith.mulf %166, %123 : vector<8x32xf32>
    %168 = arith.addf %167, %165 : vector<8x32xf32>
    %169 = arith.select %125, %165, %168 : vector<8x32xi1>, vector<8x32xf32>
    %cst_61 = arith.constant 5.000000e-01 : f32
    %170 = vector.broadcast %cst_61 : f32 to vector<8x32xf32>
    %171 = arith.cmpf ogt, %169, %170 : vector<8x32xf32>
    %172 = arith.extui %171 : vector<8x32xi1> to vector<8x32xi32>
    %173 = arith.sitofp %172 : vector<8x32xi32> to vector<8x32xf32>
    %174 = arith.truncf %173 : vector<8x32xf32> to vector<8x32xbf16>
    %cst_62 = arith.constant dense<0.000000e+00> : vector<8x16xf32>
    %175 = tpu.matmul %174, %11, %cst_62 {dimension_numbers = #tpu.dot_dimension_numbers<[1], [0], [0], [1], [0, 0, 1, 1], [], []>} : vector<8x32xbf16>, vector<32x16xbf16>, vector<8x16xf32> -> vector<8x16xf32>
    %176 = arith.addf %175, %147 : vector<8x16xf32>
    %177 = arith.addf %176, %89 : vector<8x16xf32>
    %cst_63 = arith.constant 5.000000e-01 : f32
    %178 = vector.broadcast %cst_63 : f32 to vector<8x16xf32>
    %179 = arith.mulf %178, %134 : vector<8x16xf32>
    %180 = arith.addf %179, %177 : vector<8x16xf32>
    %cst_64 = arith.constant 7.500000e-01 : f32
    %181 = vector.broadcast %cst_64 : f32 to vector<8x16xf32>
    %182 = arith.mulf %181, %138 : vector<8x16xf32>
    %183 = arith.addf %182, %180 : vector<8x16xf32>
    %184 = arith.select %140, %180, %183 : vector<8x16xi1>, vector<8x16xf32>
    %cst_65 = arith.constant 5.000000e-01 : f32
    %185 = vector.broadcast %cst_65 : f32 to vector<8x16xf32>
    %186 = arith.cmpf ogt, %184, %185 : vector<8x16xf32>
    %187 = arith.extui %186 : vector<8x16xi1> to vector<8x16xi32>
    %188 = arith.sitofp %187 : vector<8x16xi32> to vector<8x16xf32>
    %189 = arith.truncf %188 : vector<8x16xf32> to vector<8x16xbf16>
    %190 = arith.extui %186 : vector<8x16xi1> to vector<8x16xi32>
    %191 = arith.sitofp %190 : vector<8x16xi32> to vector<8x16xf32>
    %192 = arith.addf %146, %191 : vector<8x16xf32>
    %cst_66 = arith.constant dense<0.000000e+00> : vector<8x16xf32>
    %193 = tpu.matmul %189, %12, %cst_66 {dimension_numbers = #tpu.dot_dimension_numbers<[1], [0], [0], [1], [0, 0, 1, 1], [], []>} : vector<8x16xbf16>, vector<16x16xbf16>, vector<8x16xf32> -> vector<8x16xf32>
    %194 = vector.extract_strided_slice %83 {offsets = [16, 0], sizes = [8, 32], strides = [1, 1]} : vector<64x32xf32> to vector<8x32xf32>
    %cst_67 = arith.constant 5.000000e-01 : f32
    %195 = vector.broadcast %cst_67 : f32 to vector<8x32xf32>
    %196 = arith.mulf %195, %151 : vector<8x32xf32>
    %197 = arith.addf %196, %194 : vector<8x32xf32>
    %cst_68 = arith.constant 7.500000e-01 : f32
    %198 = vector.broadcast %cst_68 : f32 to vector<8x32xf32>
    %199 = arith.mulf %198, %155 : vector<8x32xf32>
    %200 = arith.addf %199, %197 : vector<8x32xf32>
    %201 = arith.select %157, %197, %200 : vector<8x32xi1>, vector<8x32xf32>
    %cst_69 = arith.constant 5.000000e-01 : f32
    %202 = vector.broadcast %cst_69 : f32 to vector<8x32xf32>
    %203 = arith.cmpf ogt, %201, %202 : vector<8x32xf32>
    %204 = arith.extui %203 : vector<8x32xi1> to vector<8x32xi32>
    %205 = arith.sitofp %204 : vector<8x32xi32> to vector<8x32xf32>
    %206 = arith.truncf %205 : vector<8x32xf32> to vector<8x32xbf16>
    %cst_70 = arith.constant dense<0.000000e+00> : vector<8x32xf32>
    %207 = tpu.matmul %206, %10, %cst_70 {dimension_numbers = #tpu.dot_dimension_numbers<[1], [0], [0], [1], [0, 0, 1, 1], [], []>} : vector<8x32xbf16>, vector<32x32xbf16>, vector<8x32xf32> -> vector<8x32xf32>
    %208 = arith.addf %207, %86 : vector<8x32xf32>
    %cst_71 = arith.constant 5.000000e-01 : f32
    %209 = vector.broadcast %cst_71 : f32 to vector<8x32xf32>
    %210 = arith.mulf %209, %165 : vector<8x32xf32>
    %211 = arith.addf %210, %208 : vector<8x32xf32>
    %cst_72 = arith.constant 7.500000e-01 : f32
    %212 = vector.broadcast %cst_72 : f32 to vector<8x32xf32>
    %213 = arith.mulf %212, %169 : vector<8x32xf32>
    %214 = arith.addf %213, %211 : vector<8x32xf32>
    %215 = arith.select %171, %211, %214 : vector<8x32xi1>, vector<8x32xf32>
    %cst_73 = arith.constant 5.000000e-01 : f32
    %216 = vector.broadcast %cst_73 : f32 to vector<8x32xf32>
    %217 = arith.cmpf ogt, %215, %216 : vector<8x32xf32>
    %218 = arith.extui %217 : vector<8x32xi1> to vector<8x32xi32>
    %219 = arith.sitofp %218 : vector<8x32xi32> to vector<8x32xf32>
    %220 = arith.truncf %219 : vector<8x32xf32> to vector<8x32xbf16>
    %cst_74 = arith.constant dense<0.000000e+00> : vector<8x16xf32>
    %221 = tpu.matmul %220, %11, %cst_74 {dimension_numbers = #tpu.dot_dimension_numbers<[1], [0], [0], [1], [0, 0, 1, 1], [], []>} : vector<8x32xbf16>, vector<32x16xbf16>, vector<8x16xf32> -> vector<8x16xf32>
    %222 = arith.addf %221, %193 : vector<8x16xf32>
    %223 = arith.addf %222, %89 : vector<8x16xf32>
    %cst_75 = arith.constant 5.000000e-01 : f32
    %224 = vector.broadcast %cst_75 : f32 to vector<8x16xf32>
    %225 = arith.mulf %224, %180 : vector<8x16xf32>
    %226 = arith.addf %225, %223 : vector<8x16xf32>
    %cst_76 = arith.constant 7.500000e-01 : f32
    %227 = vector.broadcast %cst_76 : f32 to vector<8x16xf32>
    %228 = arith.mulf %227, %184 : vector<8x16xf32>
    %229 = arith.addf %228, %226 : vector<8x16xf32>
    %230 = arith.select %186, %226, %229 : vector<8x16xi1>, vector<8x16xf32>
    %cst_77 = arith.constant 5.000000e-01 : f32
    %231 = vector.broadcast %cst_77 : f32 to vector<8x16xf32>
    %232 = arith.cmpf ogt, %230, %231 : vector<8x16xf32>
    %233 = arith.extui %232 : vector<8x16xi1> to vector<8x16xi32>
    %234 = arith.sitofp %233 : vector<8x16xi32> to vector<8x16xf32>
    %235 = arith.truncf %234 : vector<8x16xf32> to vector<8x16xbf16>
    %236 = arith.extui %232 : vector<8x16xi1> to vector<8x16xi32>
    %237 = arith.sitofp %236 : vector<8x16xi32> to vector<8x16xf32>
    %238 = arith.addf %192, %237 : vector<8x16xf32>
    %cst_78 = arith.constant dense<0.000000e+00> : vector<8x16xf32>
    %239 = tpu.matmul %235, %12, %cst_78 {dimension_numbers = #tpu.dot_dimension_numbers<[1], [0], [0], [1], [0, 0, 1, 1], [], []>} : vector<8x16xbf16>, vector<16x16xbf16>, vector<8x16xf32> -> vector<8x16xf32>
    %240 = vector.extract_strided_slice %83 {offsets = [24, 0], sizes = [8, 32], strides = [1, 1]} : vector<64x32xf32> to vector<8x32xf32>
    %cst_79 = arith.constant 5.000000e-01 : f32
    %241 = vector.broadcast %cst_79 : f32 to vector<8x32xf32>
    %242 = arith.mulf %241, %197 : vector<8x32xf32>
    %243 = arith.addf %242, %240 : vector<8x32xf32>
    %cst_80 = arith.constant 7.500000e-01 : f32
    %244 = vector.broadcast %cst_80 : f32 to vector<8x32xf32>
    %245 = arith.mulf %244, %201 : vector<8x32xf32>
    %246 = arith.addf %245, %243 : vector<8x32xf32>
    %247 = arith.select %203, %243, %246 : vector<8x32xi1>, vector<8x32xf32>
    %cst_81 = arith.constant 5.000000e-01 : f32
    %248 = vector.broadcast %cst_81 : f32 to vector<8x32xf32>
    %249 = arith.cmpf ogt, %247, %248 : vector<8x32xf32>
    %250 = arith.extui %249 : vector<8x32xi1> to vector<8x32xi32>
    %251 = arith.sitofp %250 : vector<8x32xi32> to vector<8x32xf32>
    %252 = arith.truncf %251 : vector<8x32xf32> to vector<8x32xbf16>
    %cst_82 = arith.constant dense<0.000000e+00> : vector<8x32xf32>
    %253 = tpu.matmul %252, %10, %cst_82 {dimension_numbers = #tpu.dot_dimension_numbers<[1], [0], [0], [1], [0, 0, 1, 1], [], []>} : vector<8x32xbf16>, vector<32x32xbf16>, vector<8x32xf32> -> vector<8x32xf32>
    %254 = arith.addf %253, %86 : vector<8x32xf32>
    %cst_83 = arith.constant 5.000000e-01 : f32
    %255 = vector.broadcast %cst_83 : f32 to vector<8x32xf32>
    %256 = arith.mulf %255, %211 : vector<8x32xf32>
    %257 = arith.addf %256, %254 : vector<8x32xf32>
    %cst_84 = arith.constant 7.500000e-01 : f32
    %258 = vector.broadcast %cst_84 : f32 to vector<8x32xf32>
    %259 = arith.mulf %258, %215 : vector<8x32xf32>
    %260 = arith.addf %259, %257 : vector<8x32xf32>
    %261 = arith.select %217, %257, %260 : vector<8x32xi1>, vector<8x32xf32>
    %cst_85 = arith.constant 5.000000e-01 : f32
    %262 = vector.broadcast %cst_85 : f32 to vector<8x32xf32>
    %263 = arith.cmpf ogt, %261, %262 : vector<8x32xf32>
    %264 = arith.extui %263 : vector<8x32xi1> to vector<8x32xi32>
    %265 = arith.sitofp %264 : vector<8x32xi32> to vector<8x32xf32>
    %266 = arith.truncf %265 : vector<8x32xf32> to vector<8x32xbf16>
    %cst_86 = arith.constant dense<0.000000e+00> : vector<8x16xf32>
    %267 = tpu.matmul %266, %11, %cst_86 {dimension_numbers = #tpu.dot_dimension_numbers<[1], [0], [0], [1], [0, 0, 1, 1], [], []>} : vector<8x32xbf16>, vector<32x16xbf16>, vector<8x16xf32> -> vector<8x16xf32>
    %268 = arith.addf %267, %239 : vector<8x16xf32>
    %269 = arith.addf %268, %89 : vector<8x16xf32>
    %cst_87 = arith.constant 5.000000e-01 : f32
    %270 = vector.broadcast %cst_87 : f32 to vector<8x16xf32>
    %271 = arith.mulf %270, %226 : vector<8x16xf32>
    %272 = arith.addf %271, %269 : vector<8x16xf32>
    %cst_88 = arith.constant 7.500000e-01 : f32
    %273 = vector.broadcast %cst_88 : f32 to vector<8x16xf32>
    %274 = arith.mulf %273, %230 : vector<8x16xf32>
    %275 = arith.addf %274, %272 : vector<8x16xf32>
    %276 = arith.select %232, %272, %275 : vector<8x16xi1>, vector<8x16xf32>
    %cst_89 = arith.constant 5.000000e-01 : f32
    %277 = vector.broadcast %cst_89 : f32 to vector<8x16xf32>
    %278 = arith.cmpf ogt, %276, %277 : vector<8x16xf32>
    %279 = arith.extui %278 : vector<8x16xi1> to vector<8x16xi32>
    %280 = arith.sitofp %279 : vector<8x16xi32> to vector<8x16xf32>
    %281 = arith.truncf %280 : vector<8x16xf32> to vector<8x16xbf16>
    %282 = arith.extui %278 : vector<8x16xi1> to vector<8x16xi32>
    %283 = arith.sitofp %282 : vector<8x16xi32> to vector<8x16xf32>
    %284 = arith.addf %238, %283 : vector<8x16xf32>
    %cst_90 = arith.constant dense<0.000000e+00> : vector<8x16xf32>
    %285 = tpu.matmul %281, %12, %cst_90 {dimension_numbers = #tpu.dot_dimension_numbers<[1], [0], [0], [1], [0, 0, 1, 1], [], []>} : vector<8x16xbf16>, vector<16x16xbf16>, vector<8x16xf32> -> vector<8x16xf32>
    %286 = vector.extract_strided_slice %83 {offsets = [32, 0], sizes = [8, 32], strides = [1, 1]} : vector<64x32xf32> to vector<8x32xf32>
    %cst_91 = arith.constant 5.000000e-01 : f32
    %287 = vector.broadcast %cst_91 : f32 to vector<8x32xf32>
    %288 = arith.mulf %287, %243 : vector<8x32xf32>
    %289 = arith.addf %288, %286 : vector<8x32xf32>
    %cst_92 = arith.constant 7.500000e-01 : f32
    %290 = vector.broadcast %cst_92 : f32 to vector<8x32xf32>
    %291 = arith.mulf %290, %247 : vector<8x32xf32>
    %292 = arith.addf %291, %289 : vector<8x32xf32>
    %293 = arith.select %249, %289, %292 : vector<8x32xi1>, vector<8x32xf32>
    %cst_93 = arith.constant 5.000000e-01 : f32
    %294 = vector.broadcast %cst_93 : f32 to vector<8x32xf32>
    %295 = arith.cmpf ogt, %293, %294 : vector<8x32xf32>
    %296 = arith.extui %295 : vector<8x32xi1> to vector<8x32xi32>
    %297 = arith.sitofp %296 : vector<8x32xi32> to vector<8x32xf32>
    %298 = arith.truncf %297 : vector<8x32xf32> to vector<8x32xbf16>
    %cst_94 = arith.constant dense<0.000000e+00> : vector<8x32xf32>
    %299 = tpu.matmul %298, %10, %cst_94 {dimension_numbers = #tpu.dot_dimension_numbers<[1], [0], [0], [1], [0, 0, 1, 1], [], []>} : vector<8x32xbf16>, vector<32x32xbf16>, vector<8x32xf32> -> vector<8x32xf32>
    %300 = arith.addf %299, %86 : vector<8x32xf32>
    %cst_95 = arith.constant 5.000000e-01 : f32
    %301 = vector.broadcast %cst_95 : f32 to vector<8x32xf32>
    %302 = arith.mulf %301, %257 : vector<8x32xf32>
    %303 = arith.addf %302, %300 : vector<8x32xf32>
    %cst_96 = arith.constant 7.500000e-01 : f32
    %304 = vector.broadcast %cst_96 : f32 to vector<8x32xf32>
    %305 = arith.mulf %304, %261 : vector<8x32xf32>
    %306 = arith.addf %305, %303 : vector<8x32xf32>
    %307 = arith.select %263, %303, %306 : vector<8x32xi1>, vector<8x32xf32>
    %cst_97 = arith.constant 5.000000e-01 : f32
    %308 = vector.broadcast %cst_97 : f32 to vector<8x32xf32>
    %309 = arith.cmpf ogt, %307, %308 : vector<8x32xf32>
    %310 = arith.extui %309 : vector<8x32xi1> to vector<8x32xi32>
    %311 = arith.sitofp %310 : vector<8x32xi32> to vector<8x32xf32>
    %312 = arith.truncf %311 : vector<8x32xf32> to vector<8x32xbf16>
    %cst_98 = arith.constant dense<0.000000e+00> : vector<8x16xf32>
    %313 = tpu.matmul %312, %11, %cst_98 {dimension_numbers = #tpu.dot_dimension_numbers<[1], [0], [0], [1], [0, 0, 1, 1], [], []>} : vector<8x32xbf16>, vector<32x16xbf16>, vector<8x16xf32> -> vector<8x16xf32>
    %314 = arith.addf %313, %285 : vector<8x16xf32>
    %315 = arith.addf %314, %89 : vector<8x16xf32>
    %cst_99 = arith.constant 5.000000e-01 : f32
    %316 = vector.broadcast %cst_99 : f32 to vector<8x16xf32>
    %317 = arith.mulf %316, %272 : vector<8x16xf32>
    %318 = arith.addf %317, %315 : vector<8x16xf32>
    %cst_100 = arith.constant 7.500000e-01 : f32
    %319 = vector.broadcast %cst_100 : f32 to vector<8x16xf32>
    %320 = arith.mulf %319, %276 : vector<8x16xf32>
    %321 = arith.addf %320, %318 : vector<8x16xf32>
    %322 = arith.select %278, %318, %321 : vector<8x16xi1>, vector<8x16xf32>
    %cst_101 = arith.constant 5.000000e-01 : f32
    %323 = vector.broadcast %cst_101 : f32 to vector<8x16xf32>
    %324 = arith.cmpf ogt, %322, %323 : vector<8x16xf32>
    %325 = arith.extui %324 : vector<8x16xi1> to vector<8x16xi32>
    %326 = arith.sitofp %325 : vector<8x16xi32> to vector<8x16xf32>
    %327 = arith.truncf %326 : vector<8x16xf32> to vector<8x16xbf16>
    %328 = arith.extui %324 : vector<8x16xi1> to vector<8x16xi32>
    %329 = arith.sitofp %328 : vector<8x16xi32> to vector<8x16xf32>
    %330 = arith.addf %284, %329 : vector<8x16xf32>
    %cst_102 = arith.constant dense<0.000000e+00> : vector<8x16xf32>
    %331 = tpu.matmul %327, %12, %cst_102 {dimension_numbers = #tpu.dot_dimension_numbers<[1], [0], [0], [1], [0, 0, 1, 1], [], []>} : vector<8x16xbf16>, vector<16x16xbf16>, vector<8x16xf32> -> vector<8x16xf32>
    %332 = vector.extract_strided_slice %83 {offsets = [40, 0], sizes = [8, 32], strides = [1, 1]} : vector<64x32xf32> to vector<8x32xf32>
    %cst_103 = arith.constant 5.000000e-01 : f32
    %333 = vector.broadcast %cst_103 : f32 to vector<8x32xf32>
    %334 = arith.mulf %333, %289 : vector<8x32xf32>
    %335 = arith.addf %334, %332 : vector<8x32xf32>
    %cst_104 = arith.constant 7.500000e-01 : f32
    %336 = vector.broadcast %cst_104 : f32 to vector<8x32xf32>
    %337 = arith.mulf %336, %293 : vector<8x32xf32>
    %338 = arith.addf %337, %335 : vector<8x32xf32>
    %339 = arith.select %295, %335, %338 : vector<8x32xi1>, vector<8x32xf32>
    %cst_105 = arith.constant 5.000000e-01 : f32
    %340 = vector.broadcast %cst_105 : f32 to vector<8x32xf32>
    %341 = arith.cmpf ogt, %339, %340 : vector<8x32xf32>
    %342 = arith.extui %341 : vector<8x32xi1> to vector<8x32xi32>
    %343 = arith.sitofp %342 : vector<8x32xi32> to vector<8x32xf32>
    %344 = arith.truncf %343 : vector<8x32xf32> to vector<8x32xbf16>
    %cst_106 = arith.constant dense<0.000000e+00> : vector<8x32xf32>
    %345 = tpu.matmul %344, %10, %cst_106 {dimension_numbers = #tpu.dot_dimension_numbers<[1], [0], [0], [1], [0, 0, 1, 1], [], []>} : vector<8x32xbf16>, vector<32x32xbf16>, vector<8x32xf32> -> vector<8x32xf32>
    %346 = arith.addf %345, %86 : vector<8x32xf32>
    %cst_107 = arith.constant 5.000000e-01 : f32
    %347 = vector.broadcast %cst_107 : f32 to vector<8x32xf32>
    %348 = arith.mulf %347, %303 : vector<8x32xf32>
    %349 = arith.addf %348, %346 : vector<8x32xf32>
    %cst_108 = arith.constant 7.500000e-01 : f32
    %350 = vector.broadcast %cst_108 : f32 to vector<8x32xf32>
    %351 = arith.mulf %350, %307 : vector<8x32xf32>
    %352 = arith.addf %351, %349 : vector<8x32xf32>
    %353 = arith.select %309, %349, %352 : vector<8x32xi1>, vector<8x32xf32>
    %cst_109 = arith.constant 5.000000e-01 : f32
    %354 = vector.broadcast %cst_109 : f32 to vector<8x32xf32>
    %355 = arith.cmpf ogt, %353, %354 : vector<8x32xf32>
    %356 = arith.extui %355 : vector<8x32xi1> to vector<8x32xi32>
    %357 = arith.sitofp %356 : vector<8x32xi32> to vector<8x32xf32>
    %358 = arith.truncf %357 : vector<8x32xf32> to vector<8x32xbf16>
    %cst_110 = arith.constant dense<0.000000e+00> : vector<8x16xf32>
    %359 = tpu.matmul %358, %11, %cst_110 {dimension_numbers = #tpu.dot_dimension_numbers<[1], [0], [0], [1], [0, 0, 1, 1], [], []>} : vector<8x32xbf16>, vector<32x16xbf16>, vector<8x16xf32> -> vector<8x16xf32>
    %360 = arith.addf %359, %331 : vector<8x16xf32>
    %361 = arith.addf %360, %89 : vector<8x16xf32>
    %cst_111 = arith.constant 5.000000e-01 : f32
    %362 = vector.broadcast %cst_111 : f32 to vector<8x16xf32>
    %363 = arith.mulf %362, %318 : vector<8x16xf32>
    %364 = arith.addf %363, %361 : vector<8x16xf32>
    %cst_112 = arith.constant 7.500000e-01 : f32
    %365 = vector.broadcast %cst_112 : f32 to vector<8x16xf32>
    %366 = arith.mulf %365, %322 : vector<8x16xf32>
    %367 = arith.addf %366, %364 : vector<8x16xf32>
    %368 = arith.select %324, %364, %367 : vector<8x16xi1>, vector<8x16xf32>
    %cst_113 = arith.constant 5.000000e-01 : f32
    %369 = vector.broadcast %cst_113 : f32 to vector<8x16xf32>
    %370 = arith.cmpf ogt, %368, %369 : vector<8x16xf32>
    %371 = arith.extui %370 : vector<8x16xi1> to vector<8x16xi32>
    %372 = arith.sitofp %371 : vector<8x16xi32> to vector<8x16xf32>
    %373 = arith.truncf %372 : vector<8x16xf32> to vector<8x16xbf16>
    %374 = arith.extui %370 : vector<8x16xi1> to vector<8x16xi32>
    %375 = arith.sitofp %374 : vector<8x16xi32> to vector<8x16xf32>
    %376 = arith.addf %330, %375 : vector<8x16xf32>
    %cst_114 = arith.constant dense<0.000000e+00> : vector<8x16xf32>
    %377 = tpu.matmul %373, %12, %cst_114 {dimension_numbers = #tpu.dot_dimension_numbers<[1], [0], [0], [1], [0, 0, 1, 1], [], []>} : vector<8x16xbf16>, vector<16x16xbf16>, vector<8x16xf32> -> vector<8x16xf32>
    %378 = vector.extract_strided_slice %83 {offsets = [48, 0], sizes = [8, 32], strides = [1, 1]} : vector<64x32xf32> to vector<8x32xf32>
    %cst_115 = arith.constant 5.000000e-01 : f32
    %379 = vector.broadcast %cst_115 : f32 to vector<8x32xf32>
    %380 = arith.mulf %379, %335 : vector<8x32xf32>
    %381 = arith.addf %380, %378 : vector<8x32xf32>
    %cst_116 = arith.constant 7.500000e-01 : f32
    %382 = vector.broadcast %cst_116 : f32 to vector<8x32xf32>
    %383 = arith.mulf %382, %339 : vector<8x32xf32>
    %384 = arith.addf %383, %381 : vector<8x32xf32>
    %385 = arith.select %341, %381, %384 : vector<8x32xi1>, vector<8x32xf32>
    %cst_117 = arith.constant 5.000000e-01 : f32
    %386 = vector.broadcast %cst_117 : f32 to vector<8x32xf32>
    %387 = arith.cmpf ogt, %385, %386 : vector<8x32xf32>
    %388 = arith.extui %387 : vector<8x32xi1> to vector<8x32xi32>
    %389 = arith.sitofp %388 : vector<8x32xi32> to vector<8x32xf32>
    %390 = arith.truncf %389 : vector<8x32xf32> to vector<8x32xbf16>
    %cst_118 = arith.constant dense<0.000000e+00> : vector<8x32xf32>
    %391 = tpu.matmul %390, %10, %cst_118 {dimension_numbers = #tpu.dot_dimension_numbers<[1], [0], [0], [1], [0, 0, 1, 1], [], []>} : vector<8x32xbf16>, vector<32x32xbf16>, vector<8x32xf32> -> vector<8x32xf32>
    %392 = arith.addf %391, %86 : vector<8x32xf32>
    %cst_119 = arith.constant 5.000000e-01 : f32
    %393 = vector.broadcast %cst_119 : f32 to vector<8x32xf32>
    %394 = arith.mulf %393, %349 : vector<8x32xf32>
    %395 = arith.addf %394, %392 : vector<8x32xf32>
    %cst_120 = arith.constant 7.500000e-01 : f32
    %396 = vector.broadcast %cst_120 : f32 to vector<8x32xf32>
    %397 = arith.mulf %396, %353 : vector<8x32xf32>
    %398 = arith.addf %397, %395 : vector<8x32xf32>
    %399 = arith.select %355, %395, %398 : vector<8x32xi1>, vector<8x32xf32>
    %cst_121 = arith.constant 5.000000e-01 : f32
    %400 = vector.broadcast %cst_121 : f32 to vector<8x32xf32>
    %401 = arith.cmpf ogt, %399, %400 : vector<8x32xf32>
    %402 = arith.extui %401 : vector<8x32xi1> to vector<8x32xi32>
    %403 = arith.sitofp %402 : vector<8x32xi32> to vector<8x32xf32>
    %404 = arith.truncf %403 : vector<8x32xf32> to vector<8x32xbf16>
    %cst_122 = arith.constant dense<0.000000e+00> : vector<8x16xf32>
    %405 = tpu.matmul %404, %11, %cst_122 {dimension_numbers = #tpu.dot_dimension_numbers<[1], [0], [0], [1], [0, 0, 1, 1], [], []>} : vector<8x32xbf16>, vector<32x16xbf16>, vector<8x16xf32> -> vector<8x16xf32>
    %406 = arith.addf %405, %377 : vector<8x16xf32>
    %407 = arith.addf %406, %89 : vector<8x16xf32>
    %cst_123 = arith.constant 5.000000e-01 : f32
    %408 = vector.broadcast %cst_123 : f32 to vector<8x16xf32>
    %409 = arith.mulf %408, %364 : vector<8x16xf32>
    %410 = arith.addf %409, %407 : vector<8x16xf32>
    %cst_124 = arith.constant 7.500000e-01 : f32
    %411 = vector.broadcast %cst_124 : f32 to vector<8x16xf32>
    %412 = arith.mulf %411, %368 : vector<8x16xf32>
    %413 = arith.addf %412, %410 : vector<8x16xf32>
    %414 = arith.select %370, %410, %413 : vector<8x16xi1>, vector<8x16xf32>
    %cst_125 = arith.constant 5.000000e-01 : f32
    %415 = vector.broadcast %cst_125 : f32 to vector<8x16xf32>
    %416 = arith.cmpf ogt, %414, %415 : vector<8x16xf32>
    %417 = arith.extui %416 : vector<8x16xi1> to vector<8x16xi32>
    %418 = arith.sitofp %417 : vector<8x16xi32> to vector<8x16xf32>
    %419 = arith.truncf %418 : vector<8x16xf32> to vector<8x16xbf16>
    %420 = arith.extui %416 : vector<8x16xi1> to vector<8x16xi32>
    %421 = arith.sitofp %420 : vector<8x16xi32> to vector<8x16xf32>
    %422 = arith.addf %376, %421 : vector<8x16xf32>
    %cst_126 = arith.constant dense<0.000000e+00> : vector<8x16xf32>
    %423 = tpu.matmul %419, %12, %cst_126 {dimension_numbers = #tpu.dot_dimension_numbers<[1], [0], [0], [1], [0, 0, 1, 1], [], []>} : vector<8x16xbf16>, vector<16x16xbf16>, vector<8x16xf32> -> vector<8x16xf32>
    %424 = vector.extract_strided_slice %83 {offsets = [56, 0], sizes = [8, 32], strides = [1, 1]} : vector<64x32xf32> to vector<8x32xf32>
    %cst_127 = arith.constant 5.000000e-01 : f32
    %425 = vector.broadcast %cst_127 : f32 to vector<8x32xf32>
    %426 = arith.mulf %425, %381 : vector<8x32xf32>
    %427 = arith.addf %426, %424 : vector<8x32xf32>
    %cst_128 = arith.constant 7.500000e-01 : f32
    %428 = vector.broadcast %cst_128 : f32 to vector<8x32xf32>
    %429 = arith.mulf %428, %385 : vector<8x32xf32>
    %430 = arith.addf %429, %427 : vector<8x32xf32>
    %431 = arith.select %387, %427, %430 : vector<8x32xi1>, vector<8x32xf32>
    %cst_129 = arith.constant 5.000000e-01 : f32
    %432 = vector.broadcast %cst_129 : f32 to vector<8x32xf32>
    %433 = arith.cmpf ogt, %431, %432 : vector<8x32xf32>
    %434 = arith.extui %433 : vector<8x32xi1> to vector<8x32xi32>
    %435 = arith.sitofp %434 : vector<8x32xi32> to vector<8x32xf32>
    %436 = arith.truncf %435 : vector<8x32xf32> to vector<8x32xbf16>
    %cst_130 = arith.constant dense<0.000000e+00> : vector<8x32xf32>
    %437 = tpu.matmul %436, %10, %cst_130 {dimension_numbers = #tpu.dot_dimension_numbers<[1], [0], [0], [1], [0, 0, 1, 1], [], []>} : vector<8x32xbf16>, vector<32x32xbf16>, vector<8x32xf32> -> vector<8x32xf32>
    %438 = arith.addf %437, %86 : vector<8x32xf32>
    %cst_131 = arith.constant 5.000000e-01 : f32
    %439 = vector.broadcast %cst_131 : f32 to vector<8x32xf32>
    %440 = arith.mulf %439, %395 : vector<8x32xf32>
    %441 = arith.addf %440, %438 : vector<8x32xf32>
    %cst_132 = arith.constant 7.500000e-01 : f32
    %442 = vector.broadcast %cst_132 : f32 to vector<8x32xf32>
    %443 = arith.mulf %442, %399 : vector<8x32xf32>
    %444 = arith.addf %443, %441 : vector<8x32xf32>
    %445 = arith.select %401, %441, %444 : vector<8x32xi1>, vector<8x32xf32>
    %cst_133 = arith.constant 5.000000e-01 : f32
    %446 = vector.broadcast %cst_133 : f32 to vector<8x32xf32>
    %447 = arith.cmpf ogt, %445, %446 : vector<8x32xf32>
    %448 = arith.extui %447 : vector<8x32xi1> to vector<8x32xi32>
    %449 = arith.sitofp %448 : vector<8x32xi32> to vector<8x32xf32>
    %450 = arith.truncf %449 : vector<8x32xf32> to vector<8x32xbf16>
    %cst_134 = arith.constant dense<0.000000e+00> : vector<8x16xf32>
    %451 = tpu.matmul %450, %11, %cst_134 {dimension_numbers = #tpu.dot_dimension_numbers<[1], [0], [0], [1], [0, 0, 1, 1], [], []>} : vector<8x32xbf16>, vector<32x16xbf16>, vector<8x16xf32> -> vector<8x16xf32>
    %452 = arith.addf %451, %423 : vector<8x16xf32>
    %453 = arith.addf %452, %89 : vector<8x16xf32>
    %cst_135 = arith.constant 5.000000e-01 : f32
    %454 = vector.broadcast %cst_135 : f32 to vector<8x16xf32>
    %455 = arith.mulf %454, %410 : vector<8x16xf32>
    %456 = arith.addf %455, %453 : vector<8x16xf32>
    %cst_136 = arith.constant 7.500000e-01 : f32
    %457 = vector.broadcast %cst_136 : f32 to vector<8x16xf32>
    %458 = arith.mulf %457, %414 : vector<8x16xf32>
    %459 = arith.addf %458, %456 : vector<8x16xf32>
    %460 = arith.select %416, %456, %459 : vector<8x16xi1>, vector<8x16xf32>
    %cst_137 = arith.constant 5.000000e-01 : f32
    %461 = vector.broadcast %cst_137 : f32 to vector<8x16xf32>
    %462 = arith.cmpf ogt, %460, %461 : vector<8x16xf32>
    %463 = arith.extui %462 : vector<8x16xi1> to vector<8x16xi32>
    %464 = arith.sitofp %463 : vector<8x16xi32> to vector<8x16xf32>
    %465 = arith.addf %422, %464 : vector<8x16xf32>
    %466 = vector.extract_strided_slice %14 {offsets = [0, 0], sizes = [16, 4], strides = [1, 1]} : vector<17x4xf32> to vector<16x4xf32>
    %467 = vector.extract_strided_slice %14 {offsets = [16, 0], sizes = [1, 4], strides = [1, 1]} : vector<17x4xf32> to vector<1x4xf32>
    %cst_138 = arith.constant dense<0.000000e+00> : vector<8x4xf32>
    %468 = tpu.matmul %465, %466, %cst_138 {dimension_numbers = #tpu.dot_dimension_numbers<[1], [0], [0], [1], [0, 0, 1, 1], [], []>} : vector<8x16xf32>, vector<16x4xf32>, vector<8x4xf32> -> vector<8x4xf32>
    %cst_139 = arith.constant 8.000000e+00 : f32
    %469 = vector.broadcast %cst_139 : f32 to vector<1x4xf32>
    %470 = arith.mulf %469, %467 : vector<1x4xf32>
    %471 = vector.broadcast %470 : vector<1x4xf32> to vector<8x4xf32>
    %472 = arith.addf %468, %471 : vector<8x4xf32>
    %473 = math.tanh %472 : vector<8x4xf32>
    %cst_140 = arith.constant 1.000000e+00 : f32
    %474 = vector.broadcast %cst_140 : f32 to vector<8x4xf32>
    %475 = arith.mulf %474, %473 : vector<8x4xf32>
    %c0_141 = arith.constant 0 : index
    %c0_142 = arith.constant 0 : index
    %476 = vector.load %arg9[%c0_141, %c0_142] : memref<8x4xf32, #tpu.memory_space<vmem>>, vector<8x4xf32>
    tpu.vector_store %arg9[%c0_141, %c0_142], %475 {strides = array<i32>} : memref<8x4xf32, #tpu.memory_space<vmem>>, vector<8x4xf32>,
    return
  }
  func.func @transform_0(%arg0: i32) -> (i32, i32) {
    %c0_i32 = arith.constant 0 : i32
    %c0_i32_0 = arith.constant 0 : i32
    return %arg0, %c0_i32 : i32, i32
  }
  func.func @transform_1(%arg0: i32) -> (i32, i32) {
    %c0_i32 = arith.constant 0 : i32
    %c0_i32_0 = arith.constant 0 : i32
    %c0_i32_1 = arith.constant 0 : i32
    return %c0_i32, %c0_i32_0 : i32, i32
  }
  func.func @transform_2(%arg0: i32) -> (i32, i32) {
    %c0_i32 = arith.constant 0 : i32
    %c0_i32_0 = arith.constant 0 : i32
    %c0_i32_1 = arith.constant 0 : i32
    return %c0_i32, %c0_i32_0 : i32, i32
  }
  func.func @transform_3(%arg0: i32) -> (i32, i32) {
    %c0_i32 = arith.constant 0 : i32
    %c0_i32_0 = arith.constant 0 : i32
    %c0_i32_1 = arith.constant 0 : i32
    return %c0_i32, %c0_i32_0 : i32, i32
  }
  func.func @transform_4(%arg0: i32) -> (i32, i32) {
    %c0_i32 = arith.constant 0 : i32
    %c0_i32_0 = arith.constant 0 : i32
    %c0_i32_1 = arith.constant 0 : i32
    return %c0_i32, %c0_i32_0 : i32, i32
  }
  func.func @transform_5(%arg0: i32) -> (i32, i32) {
    %c0_i32 = arith.constant 0 : i32
    %c0_i32_0 = arith.constant 0 : i32
    %c0_i32_1 = arith.constant 0 : i32
    return %c0_i32, %c0_i32_0 : i32, i32
  }
  func.func @transform_6(%arg0: i32) -> (i32, i32) {
    %c0_i32 = arith.constant 0 : i32
    %c0_i32_0 = arith.constant 0 : i32
    %c0_i32_1 = arith.constant 0 : i32
    return %c0_i32, %c0_i32_0 : i32, i32
  }
  func.func @transform_7(%arg0: i32) -> (i32, i32) {
    %c0_i32 = arith.constant 0 : i32
    %c0_i32_0 = arith.constant 0 : i32
    %c0_i32_1 = arith.constant 0 : i32
    return %c0_i32, %c0_i32_0 : i32, i32
  }
  func.func @transform_8(%arg0: i32) -> (i32, i32) {
    %c0_i32 = arith.constant 0 : i32
    %c0_i32_0 = arith.constant 0 : i32
    return %arg0, %c0_i32 : i32, i32
  }
}

</mosaic_0001>

<llo_original>
// kernel: tpu_custom_call.1
$region0: #{tpu_custom_call.1}
  #allocation0 [shape = 'u32[]', space=smem, size = 0x4, offset = 0x4, fixed_abs, tag = 'smem constant byte address 0x4 - core index']
  #allocation1 [shape = 'u32[144,128]{1,0:T(1,128)}', space=vmem, size = 0x12000, scoped, tag = 'internal scratch']
  %s0 = inlined_call_operand.vmem [shape: f32[8,32], index: 0, kind: input, shape index: {}]
  %s1 = inlined_call_operand.hbm [shape: f32[2,32], index: 1, kind: input, shape index: {}]
  %s2 = inlined_call_operand.vmem [shape: bf16[32,32], index: 2, kind: input, shape index: {}]
  %s3 = inlined_call_operand.vmem [shape: bf16[32,32], index: 3, kind: input, shape index: {}]
  %s4 = inlined_call_operand.vmem [shape: bf16[32,16], index: 4, kind: input, shape index: {}]
  %s5 = inlined_call_operand.vmem [shape: bf16[16,16], index: 5, kind: input, shape index: {}]
  %s6 = inlined_call_operand.vmem [shape: f32[1,80], index: 6, kind: input, shape index: {}]
  %s7 = inlined_call_operand.vmem [shape: f32[17,4], index: 7, kind: input, shape index: {}]
  %s8 = inlined_call_operand.vmem [shape: f32[8,4], index: 8, kind: output, shape index: {}]
  %s9 = sld [smem:[#allocation0]]
  $region46: #{tpu_custom_call.1} parent=0
    _
  %s11 = ssub.s32 1, %s9
  %s12 = scalar_select 0, %s11, %s9
  $region1: #{tpu_custom_call.1} parent=0
    #allocation2 [shape = 'u8[1024]{0}', space=vmem, size = 0x400, scoped, tag = 'input window, operand 1, single buffered']
    #allocation3 [shape = 's32[1]{0}', space=sflag, size = 0x4, scoped, tag = 'scoped memory for tpu_custom_call.1']
    %13 = vsyncpa [#allocation3], 0
    // Predicated region
    $region2: #{tpu_custom_call.1} parent=1 // pred_check
      _
    $region3: #{tpu_custom_call.1} parent=1 // pred_check_branch
      %15 = sbr.rel (0) target = $region5
    $region4: #{tpu_custom_call.1} parent=1 // pred_region
      _
    $region5: #{tpu_custom_call.1} parent=1 // pred_fallthru
      _
    // Predicated region
    $region6: #{tpu_custom_call.1} parent=1 // pred_check
      _
    $region7: #{tpu_custom_call.1} parent=1 // pred_check_branch
      %17 = sbr.rel (0) target = $region9
    $region8: #{tpu_custom_call.1} parent=1 // pred_region
      %s19 = ssub.s32 32, 32
      %20 = vsyncadd [#allocation3], %s19
      %s22 = sshll.u32 [#allocation2], 4
      %s23 = int_to_ptr.vmem [resolvable:$true] %s22
      %25 = dma.hbm_to_vmem [thread:$0]  %s1, 32, %s23, [#allocation3]
    $region9: #{tpu_custom_call.1} parent=1 // pred_fallthru
      _
    // Predicated region
    $region10: #{tpu_custom_call.1} parent=1 // pred_check
      _
    $region11: #{tpu_custom_call.1} parent=1 // pred_check_branch
      %27 = sbr.rel (0) target = $region13
    $region12: #{tpu_custom_call.1} parent=1 // pred_region
      _
    $region13: #{tpu_custom_call.1} parent=1 // pred_fallthru
      _
    // Predicated region
    $region14: #{tpu_custom_call.1} parent=1 // pred_check
      _
    $region15: #{tpu_custom_call.1} parent=1 // pred_check_branch
      %29 = sbr.rel (0) target = $region17
    $region16: #{tpu_custom_call.1} parent=1 // pred_region
      _
    $region17: #{tpu_custom_call.1} parent=1 // pred_fallthru
      _
    // Predicated region
    $region18: #{tpu_custom_call.1} parent=1 // pred_check
      _
    $region19: #{tpu_custom_call.1} parent=1 // pred_check_branch
      %31 = sbr.rel (0) target = $region21
    $region20: #{tpu_custom_call.1} parent=1 // pred_region
      _
    $region21: #{tpu_custom_call.1} parent=1 // pred_fallthru
      _
    // Predicated region
    $region22: #{tpu_custom_call.1} parent=1 // pred_check
      _
    $region23: #{tpu_custom_call.1} parent=1 // pred_check_branch
      %33 = sbr.rel (0) target = $region25
    $region24: #{tpu_custom_call.1} parent=1 // pred_region
      _
    $region25: #{tpu_custom_call.1} parent=1 // pred_fallthru
      _
    // Predicated region
    $region26: #{tpu_custom_call.1} parent=1 // pred_check
      _
    $region27: #{tpu_custom_call.1} parent=1 // pred_check_branch
      %35 = sbr.rel (0) target = $region29
    $region28: #{tpu_custom_call.1} parent=1 // pred_region
      _
    $region29: #{tpu_custom_call.1} parent=1 // pred_fallthru
      _
    // Predicated region
    $region30: #{tpu_custom_call.1} parent=1 // pred_check
      _
    $region31: #{tpu_custom_call.1} parent=1 // pred_check_branch
      %37 = sbr.rel (0) target = $region33
    $region32: #{tpu_custom_call.1} parent=1 // pred_region
      _
    $region33: #{tpu_custom_call.1} parent=1 // pred_fallthru
      _
    // Predicated region
    $region34: #{tpu_custom_call.1} parent=1 // pred_check
      _
    $region35: #{tpu_custom_call.1} parent=1 // pred_check_branch
      %39 = sbr.rel (0) target = $region37
    $region36: #{tpu_custom_call.1} parent=1 // pred_region
      %40 = dma.done [#allocation3], 32
    $region37: #{tpu_custom_call.1} parent=1 // pred_fallthru
      _
    %v42 = vld [vmem:[%s0] sm:$0xff]
    %v43 = vld [vmem:[#allocation2] sm:$0x1]
    %v44 = vld [vmem:[#allocation2 + $0x1] sm:$0x1]
    %v45 = vlaneseq
    %v46 = vshrl.u32 %v45, 7
    %v47 = vsub.s32 0, %v46
    %v48 = vrot.slane %v43, %v47
    %v49 = vsub.f32 %v42, %v48
    %v50 = vlaneseq
    %v51 = vshrl.u32 %v50, 7
    %v52 = vsub.s32 0, %v51
    %v53 = vrot.slane %v44, %v52
    %v54 = vmul.f32 %v53, %v49
    %v55 = vmul.f32 %v54, %v49
    %v56 = vmul.f32 %v55, 1.442695
    %v57 = vpow.pop %v56
    %v58 = vld [vmem:[%s2] sm:$0xf]
    %v59 = vld [vmem:[%s2 + $0x4] sm:$0xf]
    %v60 = vld [vmem:[%s2 + $0x8] sm:$0xf]
    %v61 = vld [vmem:[%s2 + $0xc] sm:$0xf]
    %v62 = vld [vmem:[%s3] sm:$0xf]
    %v63 = vld [vmem:[%s3 + $0x4] sm:$0xf]
    %v64 = vld [vmem:[%s3 + $0x8] sm:$0xf]
    %v65 = vld [vmem:[%s3 + $0xc] sm:$0xf]
    %v66 = vld [vmem:[%s4] sm:$0xf]
    %v67 = vld [vmem:[%s4 + $0x4] sm:$0xf]
    %v68 = vld [vmem:[%s4 + $0x8] sm:$0xf]
    %v69 = vld [vmem:[%s4 + $0xc] sm:$0xf]
    %v70 = vld [vmem:[%s5] sm:$0xf]
    %v71 = vld [vmem:[%s5 + $0x4] sm:$0xf]
    %v72 = vld [vmem:[%s6] sm:$0x1]
    %v73 = vld [vmem:[%s7] sm:$0xff]
    %v74 = vld [vmem:[%s7 + $0x8] sm:$0xff]
    %v75 = vld [vmem:[%s7 + $0x10] sm:$0x1]
    %v76 = vadd.f32 %v57, 0.0
    %vm77 = vcmp.gt.f32.partialorder %v76, 0.999
    %v78 = vsel %vm77, 1, 0
    %v79 = vcvt.s32.f32 %v78
    %v80 = vmul.f32 %v79, 0.999
    %v81 = vsub.f32 %v76, %v80
    %v82 = vadd.f32 %v81, %v57
    %vm83 = vcmp.gt.f32.partialorder %v82, 0.999
    %v84 = vsel %vm83, 1, 0
    %v85 = vcvt.s32.f32 %v84
    %v86 = vmul.f32 %v85, 0.999
    %v87 = vsub.f32 %v82, %v86
    %v88 = vadd.f32 %v87, %v57
    %vm89 = vcmp.gt.f32.partialorder %v88, 0.999
    %v90 = vsel %vm89, 1, 0
    %v91 = vcvt.s32.f32 %v90
    %v92 = vmul.f32 %v91, 0.999
    %v93 = vsub.f32 %v88, %v92
    %v94 = vadd.f32 %v93, %v57
    %vm95 = vcmp.gt.f32.partialorder %v94, 0.999
    %v96 = vsel %vm95, 1, 0
    %v97 = vcvt.s32.f32 %v96
    %v98 = vmul.f32 %v97, 0.999
    %v99 = vsub.f32 %v94, %v98
    %v100 = vadd.f32 %v99, %v57
    %vm101 = vcmp.gt.f32.partialorder %v100, 0.999
    %v102 = vsel %vm101, 1, 0
    %v103 = vcvt.s32.f32 %v102
    %v104 = vmul.f32 %v103, 0.999
    %v105 = vsub.f32 %v100, %v104
    %v106 = vadd.f32 %v105, %v57
    %vm107 = vcmp.gt.f32.partialorder %v106, 0.999
    %v108 = vsel %vm107, 1, 0
    %v109 = vcvt.s32.f32 %v108
    %v110 = vmul.f32 %v109, 0.999
    %v111 = vsub.f32 %v106, %v110
    %v112 = vadd.f32 %v111, %v57
    %vm113 = vcmp.gt.f32.partialorder %v112, 0.999
    %v114 = vsel %vm113, 1, 0
    %v115 = vcvt.s32.f32 %v114
    %v116 = vmul.f32 %v115, 0.999
    %v117 = vsub.f32 %v112, %v116
    %v118 = vadd.f32 %v117, %v57
    %vm119 = vcmp.gt.f32.partialorder %v118, 0.999
    %v120 = vsel %vm119, 1, 0
    %v121 = vcvt.s32.f32 %v120
    %v122 = vpack.c.bf16 %v85, %v79
    %v123 = vpack.c.bf16 %v97, %v91
    %v124 = vpack.c.bf16 %v109, %v103
    %v125 = vpack.c.bf16 %v121, %v115
    %v127 = vlaneseq
    %v128 = vshrl.u32 %v127, 7
    %v129 = vsub.s32 0, %v128
    %v130 = vrot.slane %v72, %v129
    %v136 = vunpack.c.l.b16 %v58
    %v137 = vunpack.c.l.b16 %v59
    %v138 = vunpack.c.l.b16 %v60
    %v139 = vunpack.c.l.b16 %v61
    %v140 = vpack.c.b16 %v137, %v136
    %v141 = vpack.c.b16 %v139, %v138
    %vm144 = vcmask 261120
    %v146 = vsel %vm144, %v122, 0
    %v149 = vsel %vm144, %v123, 0
    %v152 = vsel %vm144, %v124, 0
    %v155 = vsel %vm144, %v125, 0
    %157 = vmatprep.subr.bf16.mxu0 0
    %158 = vmatpush1.bf16.msra.mxu0 0
    %159 = vmatprep.subr.bf16.mxu0 0
    %160 = vmatpush1.bf16.msra.mxu0 0
    %161 = vmatprep.subr.bf16.mxu0 0
    %162 = vmatpush1.bf16.msra.mxu0 0
    %163 = vmatprep.subr.bf16.mxu0 0
    %164 = vmatpush1.bf16.msra.mxu0 0
    %165 = vmatprep.subr.bf16.mxu0 0
    %166 = vmatpush1.bf16.msra.mxu0 0
    %167 = vmatprep.subr.bf16.mxu0 0
    %168 = vmatpush1.bf16.msra.mxu0 0
    %169 = vmatprep.subr.bf16.mxu0 0
    %170 = vmatpush1.bf16.msra.mxu0 %v141
    %171 = vmatprep.subr.bf16.mxu0 0
    %172 = vmatpush1.bf16.msra.mxu0 %v140
    %173 = vmatprep.subr.bf16.mxu0 0
    %174 = vmatpush2.bf16.msra.mxu0 0
    %175 = vmatprep.subr.bf16.mxu0 0
    %176 = vmatpush2.bf16.msra.mxu0 0
    %177 = vmatprep.subr.bf16.mxu0 0
    %178 = vmatpush2.bf16.msra.mxu0 0
    %179 = vmatprep.subr.bf16.mxu0 0
    %180 = vmatpush2.bf16.msra.mxu0 0
    %181 = vmatprep.subr.bf16.mxu0 0
    %182 = vmatpush2.bf16.msra.mxu0 0
    %183 = vmatprep.subr.bf16.mxu0 0
    %184 = vmatpush2.bf16.msra.mxu0 0
    %185 = vmatprep.subr.bf16.mxu0 0
    %186 = vmatpush2.bf16.msra.mxu0 0
    %187 = vmatprep.subr.bf16.mxu0 0
    %188 = vmatpush2.bf16.msra.mxu0 0
    %189 = vmatprep.mubr.bf16.mxu0 0
    %190 = vmatmul.mubr.bf16.gmra.mxu0 %v146
    %v191 = vpop.f32.mrf.mxu0
    %v192 = vadd.f32 %v130, %v191
    %v193 = vpop.f32.mrf.mxu0
    %v194 = vpop.f32.mrf.mxu0
    %v195 = vadd.f32 %v130, %v194
    %v196 = vpop.f32.mrf.mxu0
    %197 = vmatprep.mubr.bf16.mxu0 0
    %198 = vmatmul.mubr.bf16.gmra.mxu0 %v149
    %v199 = vpop.f32.mrf.mxu0
    %v200 = vadd.f32 %v130, %v199
    %v201 = vpop.f32.mrf.mxu0
    %v202 = vpop.f32.mrf.mxu0
    %v203 = vadd.f32 %v130, %v202
    %v204 = vpop.f32.mrf.mxu0
    %205 = vmatprep.mubr.bf16.mxu0 0
    %206 = vmatmul.mubr.bf16.gmra.mxu0 %v152
    %v207 = vpop.f32.mrf.mxu0
    %v208 = vadd.f32 %v130, %v207
    %v209 = vpop.f32.mrf.mxu0
    %v210 = vpop.f32.mrf.mxu0
    %v211 = vadd.f32 %v130, %v210
    %v212 = vpop.f32.mrf.mxu0
    %213 = vmatprep.mubr.bf16.mxu0 0
    %214 = vmatmul.mubr.bf16.gmra.mxu0 %v155
    %v215 = vpop.f32.mrf.mxu0
    %v216 = vadd.f32 %v130, %v215
    %v217 = vpop.f32.mrf.mxu0
    %v218 = vpop.f32.mrf.mxu0
    %v219 = vadd.f32 %v130, %v218
    %v220 = vpop.f32.mrf.mxu0
    %221 = vdwg.mxu0
    %v224 = vunpack.c.l.b16 %v70
    %v225 = vunpack.c.l.b16 %v71
    %v226 = vpack.c.b16 %v225, %v224
    %vm228 = vcmask 130048
    %v230 = vsel %vm228, 0, 0
    %232 = vmatprep.subr.bf16.mxu0 0
    %233 = vmatpush1.bf16.msra.mxu0 0
    %234 = vmatprep.subr.bf16.mxu0 0
    %235 = vmatpush1.bf16.msra.mxu0 0
    %236 = vmatprep.subr.bf16.mxu0 0
    %237 = vmatpush1.bf16.msra.mxu0 0
    %238 = vmatprep.subr.bf16.mxu0 0
    %239 = vmatpush1.bf16.msra.mxu0 0
    %240 = vmatprep.subr.bf16.mxu0 0
    %241 = vmatpush1.bf16.msra.mxu0 0
    %242 = vmatprep.subr.bf16.mxu0 0
    %243 = vmatpush1.bf16.msra.mxu0 0
    %244 = vmatprep.subr.bf16.mxu0 0
    %245 = vmatpush1.bf16.msra.mxu0 0
    %246 = vmatprep.subr.bf16.mxu0 0
    %247 = vmatpush1.bf16.msra.mxu0 %v226
    %248 = vmatprep.subr.bf16.mxu0 0
    %249 = vmatpush2.bf16.msra.mxu0 0
    %250 = vmatprep.subr.bf16.mxu0 0
    %251 = vmatpush2.bf16.msra.mxu0 0
    %252 = vmatprep.subr.bf16.mxu0 0
    %253 = vmatpush2.bf16.msra.mxu0 0
    %254 = vmatprep.subr.bf16.mxu0 0
    %255 = vmatpush2.bf16.msra.mxu0 0
    %256 = vmatprep.subr.bf16.mxu0 0
    %257 = vmatpush2.bf16.msra.mxu0 0
    %258 = vmatprep.subr.bf16.mxu0 0
    %259 = vmatpush2.bf16.msra.mxu0 0
    %260 = vmatprep.subr.bf16.mxu0 0
    %261 = vmatpush2.bf16.msra.mxu0 0
    %262 = vmatprep.subr.bf16.mxu0 0
    %263 = vmatpush2.bf16.msra.mxu0 0
    %264 = vmatprep.mubr.bf16.mxu0 0
    %265 = vmatmul.mubr.bf16.gmra.mxu0 %v230
    %v266 = vpop.f32.mrf.mxu0
    %v267 = vadd.f32 0.0, %v266
    %v268 = vpop.f32.mrf.mxu0
    %v269 = vpop.f32.mrf.mxu0
    %v270 = vpop.f32.mrf.mxu0
    %271 = vdwg.mxu0
    %v272 = vadd.f32 %v192, 0.0
    %v273 = vadd.f32 %v272, 0.0
    %vm274 = vcmp.gt.f32.partialorder %v273, 0.5
    %v275 = vsel %vm274, 1, 0
    %v276 = vcvt.s32.f32 %v275
    %v277 = vpack.c.bf16 %v276, %v276
    %v282 = vunpack.c.l.b16 %v62
    %v283 = vunpack.c.l.b16 %v63
    %v284 = vunpack.c.l.b16 %v64
    %v285 = vunpack.c.l.b16 %v65
    %v286 = vpack.c.b16 %v283, %v282
    %v287 = vpack.c.b16 %v285, %v284
    %290 = vrot.lane.b32.xlu0 %v130, 96
    %v291 = vpop.permute.xlu0 %290
    %v294 = vsel %vm144, %v277, 0
    %296 = vmatprep.subr.bf16.mxu0 0
    %297 = vmatpush1.bf16.msra.mxu0 0
    %298 = vmatprep.subr.bf16.mxu0 0
    %299 = vmatpush1.bf16.msra.mxu0 0
    %300 = vmatprep.subr.bf16.mxu0 0
    %301 = vmatpush1.bf16.msra.mxu0 0
    %302 = vmatprep.subr.bf16.mxu0 0
    %303 = vmatpush1.bf16.msra.mxu0 0
    %304 = vmatprep.subr.bf16.mxu0 0
    %305 = vmatpush1.bf16.msra.mxu0 0
    %306 = vmatprep.subr.bf16.mxu0 0
    %307 = vmatpush1.bf16.msra.mxu0 0
    %308 = vmatprep.subr.bf16.mxu0 0
    %309 = vmatpush1.bf16.msra.mxu0 %v287
    %310 = vmatprep.subr.bf16.mxu0 0
    %311 = vmatpush1.bf16.msra.mxu0 %v286
    %312 = vmatprep.subr.bf16.mxu0 0
    %313 = vmatpush2.bf16.msra.mxu0 0
    %314 = vmatprep.subr.bf16.mxu0 0
    %315 = vmatpush2.bf16.msra.mxu0 0
    %316 = vmatprep.subr.bf16.mxu0 0
    %317 = vmatpush2.bf16.msra.mxu0 0
    %318 = vmatprep.subr.bf16.mxu0 0
    %319 = vmatpush2.bf16.msra.mxu0 0
    %320 = vmatprep.subr.bf16.mxu0 0
    %321 = vmatpush2.bf16.msra.mxu0 0
    %322 = vmatprep.subr.bf16.mxu0 0
    %323 = vmatpush2.bf16.msra.mxu0 0
    %324 = vmatprep.subr.bf16.mxu0 0
    %325 = vmatpush2.bf16.msra.mxu0 0
    %326 = vmatprep.subr.bf16.mxu0 0
    %327 = vmatpush2.bf16.msra.mxu0 0
    %328 = vmatprep.mubr.bf16.mxu0 0
    %329 = vmatmul.mubr.bf16.gmra.mxu0 %v294
    %v330 = vpop.f32.mrf.mxu0
    %v331 = vadd.f32 %v291, %v330
    %v332 = vpop.f32.mrf.mxu0
    %v333 = vpop.f32.mrf.mxu0
    %v334 = vpop.f32.mrf.mxu0
    %335 = vdwg.mxu0
    %v336 = vadd.f32 %v331, 0.0
    %v337 = vadd.f32 %v336, 0.0
    %vm338 = vcmp.gt.f32.partialorder %v337, 0.5
    %v339 = vsel %vm338, 1, 0
    %v340 = vcvt.s32.f32 %v339
    %v341 = vpack.c.bf16 %v340, %v340
    %v346 = vunpack.c.l.b16 %v66
    %v347 = vunpack.c.l.b16 %v67
    %v348 = vunpack.c.l.b16 %v68
    %v349 = vunpack.c.l.b16 %v69
    %v350 = vpack.c.b16 %v347, %v346
    %v351 = vpack.c.b16 %v349, %v348
    %v355 = vsel %vm144, %v341, 0
    %357 = vmatprep.subr.bf16.mxu0 0
    %358 = vmatpush1.bf16.msra.mxu0 0
    %359 = vmatprep.subr.bf16.mxu0 0
    %360 = vmatpush1.bf16.msra.mxu0 0
    %361 = vmatprep.subr.bf16.mxu0 0
    %362 = vmatpush1.bf16.msra.mxu0 0
    %363 = vmatprep.subr.bf16.mxu0 0
    %364 = vmatpush1.bf16.msra.mxu0 0
    %365 = vmatprep.subr.bf16.mxu0 0
    %366 = vmatpush1.bf16.msra.mxu0 0
    %367 = vmatprep.subr.bf16.mxu0 0
    %368 = vmatpush1.bf16.msra.mxu0 0
    %369 = vmatprep.subr.bf16.mxu0 0
    %370 = vmatpush1.bf16.msra.mxu0 %v351
    %371 = vmatprep.subr.bf16.mxu0 0
    %372 = vmatpush1.bf16.msra.mxu0 %v350
    %373 = vmatprep.subr.bf16.mxu0 0
    %374 = vmatpush2.bf16.msra.mxu0 0
    %375 = vmatprep.subr.bf16.mxu0 0
    %376 = vmatpush2.bf16.msra.mxu0 0
    %377 = vmatprep.subr.bf16.mxu0 0
    %378 = vmatpush2.bf16.msra.mxu0 0
    %379 = vmatprep.subr.bf16.mxu0 0
    %380 = vmatpush2.bf16.msra.mxu0 0
    %381 = vmatprep.subr.bf16.mxu0 0
    %382 = vmatpush2.bf16.msra.mxu0 0
    %383 = vmatprep.subr.bf16.mxu0 0
    %384 = vmatpush2.bf16.msra.mxu0 0
    %385 = vmatprep.subr.bf16.mxu0 0
    %386 = vmatpush2.bf16.msra.mxu0 0
    %387 = vmatprep.subr.bf16.mxu0 0
    %388 = vmatpush2.bf16.msra.mxu0 0
    %389 = vmatprep.mubr.bf16.mxu0 0
    %390 = vmatmul.mubr.bf16.gmra.mxu0 %v355
    %v391 = vpop.f32.mrf.mxu0
    %v392 = vadd.f32 %v267, %v391
    %v393 = vpop.f32.mrf.mxu0
    %v394 = vpop.f32.mrf.mxu0
    %v395 = vpop.f32.mrf.mxu0
    %396 = vdwg.mxu0
    %397 = vrot.lane.b32.xlu0 %v130, 64
    %v398 = vpop.permute.xlu0 %397
    %v400 = vadd.f32 %v392, %v398
    %v401 = vadd.f32 %v400, 0.0
    %v402 = vadd.f32 %v401, 0.0
    %vm403 = vcmp.gt.f32.partialorder %v402, 0.5
    %v404 = vsel %vm403, 1, 0
    %v405 = vcvt.s32.f32 %v404
    %v406 = vpack.c.bf16 %v405, %v405
    %v407 = vadd.f32 %v405, 0.0
    %v409 = vsel %vm228, %v406, 0
    %411 = vmatprep.subr.bf16.mxu0 0
    %412 = vmatpush1.bf16.msra.mxu0 0
    %413 = vmatprep.subr.bf16.mxu0 0
    %414 = vmatpush1.bf16.msra.mxu0 0
    %415 = vmatprep.subr.bf16.mxu0 0
    %416 = vmatpush1.bf16.msra.mxu0 0
    %417 = vmatprep.subr.bf16.mxu0 0
    %418 = vmatpush1.bf16.msra.mxu0 0
    %419 = vmatprep.subr.bf16.mxu0 0
    %420 = vmatpush1.bf16.msra.mxu0 0
    %421 = vmatprep.subr.bf16.mxu0 0
    %422 = vmatpush1.bf16.msra.mxu0 0
    %423 = vmatprep.subr.bf16.mxu0 0
    %424 = vmatpush1.bf16.msra.mxu0 0
    %425 = vmatprep.subr.bf16.mxu0 0
    %426 = vmatpush1.bf16.msra.mxu0 %v226
    %427 = vmatprep.subr.bf16.mxu0 0
    %428 = vmatpush2.bf16.msra.mxu0 0
    %429 = vmatprep.subr.bf16.mxu0 0
    %430 = vmatpush2.bf16.msra.mxu0 0
    %431 = vmatprep.subr.bf16.mxu0 0
    %432 = vmatpush2.bf16.msra.mxu0 0
    %433 = vmatprep.subr.bf16.mxu0 0
    %434 = vmatpush2.bf16.msra.mxu0 0
    %435 = vmatprep.subr.bf16.mxu0 0
    %436 = vmatpush2.bf16.msra.mxu0 0
    %437 = vmatprep.subr.bf16.mxu0 0
    %438 = vmatpush2.bf16.msra.mxu0 0
    %439 = vmatprep.subr.bf16.mxu0 0
    %440 = vmatpush2.bf16.msra.mxu0 0
    %441 = vmatprep.subr.bf16.mxu0 0
    %442 = vmatpush2.bf16.msra.mxu0 0
    %443 = vmatprep.mubr.bf16.mxu0 0
    %444 = vmatmul.mubr.bf16.gmra.mxu0 %v409
    %v445 = vpop.f32.mrf.mxu0
    %v446 = vadd.f32 0.0, %v445
    %v447 = vpop.f32.mrf.mxu0
    %v448 = vpop.f32.mrf.mxu0
    %v449 = vpop.f32.mrf.mxu0
    %450 = vdwg.mxu0
    %v451 = vmul.f32 %v272, 0.5
    %v452 = vadd.f32 %v451, %v195
    %v453 = vmul.f32 %v273, 0.75
    %v454 = vadd.f32 %v453, %v452
    %v455 = vsel %vm274, %v452, %v454
    %vm456 = vcmp.gt.f32.partialorder %v455, 0.5
    %v457 = vsel %vm456, 1, 0
    %v458 = vcvt.s32.f32 %v457
    %v459 = vpack.c.bf16 %v458, %v458
    %v461 = vsel %vm144, %v459, 0
    %463 = vmatprep.subr.bf16.mxu0 0
    %464 = vmatpush1.bf16.msra.mxu0 0
    %465 = vmatprep.subr.bf16.mxu0 0
    %466 = vmatpush1.bf16.msra.mxu0 0
    %467 = vmatprep.subr.bf16.mxu0 0
    %468 = vmatpush1.bf16.msra.mxu0 0
    %469 = vmatprep.subr.bf16.mxu0 0
    %470 = vmatpush1.bf16.msra.mxu0 0
    %471 = vmatprep.subr.bf16.mxu0 0
    %472 = vmatpush1.bf16.msra.mxu0 0
    %473 = vmatprep.subr.bf16.mxu0 0
    %474 = vmatpush1.bf16.msra.mxu0 0
    %475 = vmatprep.subr.bf16.mxu0 0
    %476 = vmatpush1.bf16.msra.mxu0 %v287
    %477 = vmatprep.subr.bf16.mxu0 0
    %478 = vmatpush1.bf16.msra.mxu0 %v286
    %479 = vmatprep.subr.bf16.mxu0 0
    %480 = vmatpush2.bf16.msra.mxu0 0
    %481 = vmatprep.subr.bf16.mxu0 0
    %482 = vmatpush2.bf16.msra.mxu0 0
    %483 = vmatprep.subr.bf16.mxu0 0
    %484 = vmatpush2.bf16.msra.mxu0 0
    %485 = vmatprep.subr.bf16.mxu0 0
    %486 = vmatpush2.bf16.msra.mxu0 0
    %487 = vmatprep.subr.bf16.mxu0 0
    %488 = vmatpush2.bf16.msra.mxu0 0
    %489 = vmatprep.subr.bf16.mxu0 0
    %490 = vmatpush2.bf16.msra.mxu0 0
    %491 = vmatprep.subr.bf16.mxu0 0
    %492 = vmatpush2.bf16.msra.mxu0 0
    %493 = vmatprep.subr.bf16.mxu0 0
    %494 = vmatpush2.bf16.msra.mxu0 0
    %495 = vmatprep.mubr.bf16.mxu0 0
    %496 = vmatmul.mubr.bf16.gmra.mxu0 %v461
    %v497 = vpop.f32.mrf.mxu0
    %v498 = vadd.f32 %v291, %v497
    %v499 = vpop.f32.mrf.mxu0
    %v500 = vpop.f32.mrf.mxu0
    %v501 = vpop.f32.mrf.mxu0
    %502 = vdwg.mxu0
    %v503 = vmul.f32 %v336, 0.5
    %v504 = vadd.f32 %v503, %v498
    %v505 = vmul.f32 %v337, 0.75
    %v506 = vadd.f32 %v505, %v504
    %v507 = vsel %vm338, %v504, %v506
    %vm508 = vcmp.gt.f32.partialorder %v507, 0.5
    %v509 = vsel %vm508, 1, 0
    %v510 = vcvt.s32.f32 %v509
    %v511 = vpack.c.bf16 %v510, %v510
    %v513 = vsel %vm144, %v511, 0
    %515 = vmatprep.subr.bf16.mxu0 0
    %516 = vmatpush1.bf16.msra.mxu0 0
    %517 = vmatprep.subr.bf16.mxu0 0
    %518 = vmatpush1.bf16.msra.mxu0 0
    %519 = vmatprep.subr.bf16.mxu0 0
    %520 = vmatpush1.bf16.msra.mxu0 0
    %521 = vmatprep.subr.bf16.mxu0 0
    %522 = vmatpush1.bf16.msra.mxu0 0
    %523 = vmatprep.subr.bf16.mxu0 0
    %524 = vmatpush1.bf16.msra.mxu0 0
    %525 = vmatprep.subr.bf16.mxu0 0
    %526 = vmatpush1.bf16.msra.mxu0 0
    %527 = vmatprep.subr.bf16.mxu0 0
    %528 = vmatpush1.bf16.msra.mxu0 %v351
    %529 = vmatprep.subr.bf16.mxu0 0
    %530 = vmatpush1.bf16.msra.mxu0 %v350
    %531 = vmatprep.subr.bf16.mxu0 0
    %532 = vmatpush2.bf16.msra.mxu0 0
    %533 = vmatprep.subr.bf16.mxu0 0
    %534 = vmatpush2.bf16.msra.mxu0 0
    %535 = vmatprep.subr.bf16.mxu0 0
    %536 = vmatpush2.bf16.msra.mxu0 0
    %537 = vmatprep.subr.bf16.mxu0 0
    %538 = vmatpush2.bf16.msra.mxu0 0
    %539 = vmatprep.subr.bf16.mxu0 0
    %540 = vmatpush2.bf16.msra.mxu0 0
    %541 = vmatprep.subr.bf16.mxu0 0
    %542 = vmatpush2.bf16.msra.mxu0 0
    %543 = vmatprep.subr.bf16.mxu0 0
    %544 = vmatpush2.bf16.msra.mxu0 0
    %545 = vmatprep.subr.bf16.mxu0 0
    %546 = vmatpush2.bf16.msra.mxu0 0
    %547 = vmatprep.mubr.bf16.mxu0 0
    %548 = vmatmul.mubr.bf16.gmra.mxu0 %v513
    %v549 = vpop.f32.mrf.mxu0
    %v550 = vadd.f32 %v446, %v549
    %v551 = vpop.f32.mrf.mxu0
    %v552 = vpop.f32.mrf.mxu0
    %v553 = vpop.f32.mrf.mxu0
    %554 = vdwg.mxu0
    %v555 = vadd.f32 %v550, %v398
    %v556 = vmul.f32 %v401, 0.5
    %v557 = vadd.f32 %v556, %v555
    %v558 = vmul.f32 %v402, 0.75
    %v559 = vadd.f32 %v558, %v557
    %v560 = vsel %vm403, %v557, %v559
    %vm561 = vcmp.gt.f32.partialorder %v560, 0.5
    %v562 = vsel %vm561, 1, 0
    %v563 = vcvt.s32.f32 %v562
    %v564 = vpack.c.bf16 %v563, %v563
    %v565 = vadd.f32 %v407, %v563
    %v567 = vsel %vm228, %v564, 0
    %569 = vmatprep.subr.bf16.mxu0 0
    %570 = vmatpush1.bf16.msra.mxu0 0
    %571 = vmatprep.subr.bf16.mxu0 0
    %572 = vmatpush1.bf16.msra.mxu0 0
    %573 = vmatprep.subr.bf16.mxu0 0
    %574 = vmatpush1.bf16.msra.mxu0 0
    %575 = vmatprep.subr.bf16.mxu0 0
    %576 = vmatpush1.bf16.msra.mxu0 0
    %577 = vmatprep.subr.bf16.mxu0 0
    %578 = vmatpush1.bf16.msra.mxu0 0
    %579 = vmatprep.subr.bf16.mxu0 0
    %580 = vmatpush1.bf16.msra.mxu0 0
    %581 = vmatprep.subr.bf16.mxu0 0
    %582 = vmatpush1.bf16.msra.mxu0 0
    %583 = vmatprep.subr.bf16.mxu0 0
    %584 = vmatpush1.bf16.msra.mxu0 %v226
    %585 = vmatprep.subr.bf16.mxu0 0
    %586 = vmatpush2.bf16.msra.mxu0 0
    %587 = vmatprep.subr.bf16.mxu0 0
    %588 = vmatpush2.bf16.msra.mxu0 0
    %589 = vmatprep.subr.bf16.mxu0 0
    %590 = vmatpush2.bf16.msra.mxu0 0
    %591 = vmatprep.subr.bf16.mxu0 0
    %592 = vmatpush2.bf16.msra.mxu0 0
    %593 = vmatprep.subr.bf16.mxu0 0
    %594 = vmatpush2.bf16.msra.mxu0 0
    %595 = vmatprep.subr.bf16.mxu0 0
    %596 = vmatpush2.bf16.msra.mxu0 0
    %597 = vmatprep.subr.bf16.mxu0 0
    %598 = vmatpush2.bf16.msra.mxu0 0
    %599 = vmatprep.subr.bf16.mxu0 0
    %600 = vmatpush2.bf16.msra.mxu0 0
    %601 = vmatprep.mubr.bf16.mxu0 0
    %602 = vmatmul.mubr.bf16.gmra.mxu0 %v567
    %v603 = vpop.f32.mrf.mxu0
    %v604 = vadd.f32 0.0, %v603
    %v605 = vpop.f32.mrf.mxu0
    %v606 = vpop.f32.mrf.mxu0
    %v607 = vpop.f32.mrf.mxu0
    %608 = vdwg.mxu0
    %v609 = vmul.f32 %v452, 0.5
    %v610 = vadd.f32 %v609, %v200
    %v611 = vmul.f32 %v455, 0.75
    %v612 = vadd.f32 %v611, %v610
    %v613 = vsel %vm456, %v610, %v612
    %vm614 = vcmp.gt.f32.partialorder %v613, 0.5
    %v615 = vsel %vm614, 1, 0
    %v616 = vcvt.s32.f32 %v615
    %v617 = vpack.c.bf16 %v616, %v616
    %v619 = vsel %vm144, %v617, 0
    %621 = vmatprep.subr.bf16.mxu0 0
    %622 = vmatpush1.bf16.msra.mxu0 0
    %623 = vmatprep.subr.bf16.mxu0 0
    %624 = vmatpush1.bf16.msra.mxu0 0
    %625 = vmatprep.subr.bf16.mxu0 0
    %626 = vmatpush1.bf16.msra.mxu0 0
    %627 = vmatprep.subr.bf16.mxu0 0
    %628 = vmatpush1.bf16.msra.mxu0 0
    %629 = vmatprep.subr.bf16.mxu0 0
    %630 = vmatpush1.bf16.msra.mxu0 0
    %631 = vmatprep.subr.bf16.mxu0 0
    %632 = vmatpush1.bf16.msra.mxu0 0
    %633 = vmatprep.subr.bf16.mxu0 0
    %634 = vmatpush1.bf16.msra.mxu0 %v287
    %635 = vmatprep.subr.bf16.mxu0 0
    %636 = vmatpush1.bf16.msra.mxu0 %v286
    %637 = vmatprep.subr.bf16.mxu0 0
    %638 = vmatpush2.bf16.msra.mxu0 0
    %639 = vmatprep.subr.bf16.mxu0 0
    %640 = vmatpush2.bf16.msra.mxu0 0
    %641 = vmatprep.subr.bf16.mxu0 0
    %642 = vmatpush2.bf16.msra.mxu0 0
    %643 = vmatprep.subr.bf16.mxu0 0
    %644 = vmatpush2.bf16.msra.mxu0 0
    %645 = vmatprep.subr.bf16.mxu0 0
    %646 = vmatpush2.bf16.msra.mxu0 0
    %647 = vmatprep.subr.bf16.mxu0 0
    %648 = vmatpush2.bf16.msra.mxu0 0
    %649 = vmatprep.subr.bf16.mxu0 0
    %650 = vmatpush2.bf16.msra.mxu0 0
    %651 = vmatprep.subr.bf16.mxu0 0
    %652 = vmatpush2.bf16.msra.mxu0 0
    %653 = vmatprep.mubr.bf16.mxu0 0
    %654 = vmatmul.mubr.bf16.gmra.mxu0 %v619
    %v655 = vpop.f32.mrf.mxu0
    %v656 = vadd.f32 %v291, %v655
    %v657 = vpop.f32.mrf.mxu0
    %v658 = vpop.f32.mrf.mxu0
    %v659 = vpop.f32.mrf.mxu0
    %660 = vdwg.mxu0
    %v661 = vmul.f32 %v504, 0.5
    %v662 = vadd.f32 %v661, %v656
    %v663 = vmul.f32 %v507, 0.75
    %v664 = vadd.f32 %v663, %v662
    %v665 = vsel %vm508, %v662, %v664
    %vm666 = vcmp.gt.f32.partialorder %v665, 0.5
    %v667 = vsel %vm666, 1, 0
    %v668 = vcvt.s32.f32 %v667
    %v669 = vpack.c.bf16 %v668, %v668
    %v671 = vsel %vm144, %v669, 0
    %673 = vmatprep.subr.bf16.mxu0 0
    %674 = vmatpush1.bf16.msra.mxu0 0
    %675 = vmatprep.subr.bf16.mxu0 0
    %676 = vmatpush1.bf16.msra.mxu0 0
    %677 = vmatprep.subr.bf16.mxu0 0
    %678 = vmatpush1.bf16.msra.mxu0 0
    %679 = vmatprep.subr.bf16.mxu0 0
    %680 = vmatpush1.bf16.msra.mxu0 0
    %681 = vmatprep.subr.bf16.mxu0 0
    %682 = vmatpush1.bf16.msra.mxu0 0
    %683 = vmatprep.subr.bf16.mxu0 0
    %684 = vmatpush1.bf16.msra.mxu0 0
    %685 = vmatprep.subr.bf16.mxu0 0
    %686 = vmatpush1.bf16.msra.mxu0 %v351
    %687 = vmatprep.subr.bf16.mxu0 0
    %688 = vmatpush1.bf16.msra.mxu0 %v350
    %689 = vmatprep.subr.bf16.mxu0 0
    %690 = vmatpush2.bf16.msra.mxu0 0
    %691 = vmatprep.subr.bf16.mxu0 0
    %692 = vmatpush2.bf16.msra.mxu0 0
    %693 = vmatprep.subr.bf16.mxu0 0
    %694 = vmatpush2.bf16.msra.mxu0 0
    %695 = vmatprep.subr.bf16.mxu0 0
    %696 = vmatpush2.bf16.msra.mxu0 0
    %697 = vmatprep.subr.bf16.mxu0 0
    %698 = vmatpush2.bf16.msra.mxu0 0
    %699 = vmatprep.subr.bf16.mxu0 0
    %700 = vmatpush2.bf16.msra.mxu0 0
    %701 = vmatprep.subr.bf16.mxu0 0
    %702 = vmatpush2.bf16.msra.mxu0 0
    %703 = vmatprep.subr.bf16.mxu0 0
    %704 = vmatpush2.bf16.msra.mxu0 0
    %705 = vmatprep.mubr.bf16.mxu0 0
    %706 = vmatmul.mubr.bf16.gmra.mxu0 %v671
    %v707 = vpop.f32.mrf.mxu0
    %v708 = vadd.f32 %v604, %v707
    %v709 = vpop.f32.mrf.mxu0
    %v710 = vpop.f32.mrf.mxu0
    %v711 = vpop.f32.mrf.mxu0
    %712 = vdwg.mxu0
    %v713 = vadd.f32 %v708, %v398
    %v714 = vmul.f32 %v557, 0.5
    %v715 = vadd.f32 %v714, %v713
    %v716 = vmul.f32 %v560, 0.75
    %v717 = vadd.f32 %v716, %v715
    %v718 = vsel %vm561, %v715, %v717
    %vm719 = vcmp.gt.f32.partialorder %v718, 0.5
    %v720 = vsel %vm719, 1, 0
    %v721 = vcvt.s32.f32 %v720
    %v722 = vpack.c.bf16 %v721, %v721
    %v723 = vadd.f32 %v565, %v721
    %v725 = vsel %vm228, %v722, 0
    %727 = vmatprep.subr.bf16.mxu0 0
    %728 = vmatpush1.bf16.msra.mxu0 0
    %729 = vmatprep.subr.bf16.mxu0 0
    %730 = vmatpush1.bf16.msra.mxu0 0
    %731 = vmatprep.subr.bf16.mxu0 0
    %732 = vmatpush1.bf16.msra.mxu0 0
    %733 = vmatprep.subr.bf16.mxu0 0
    %734 = vmatpush1.bf16.msra.mxu0 0
    %735 = vmatprep.subr.bf16.mxu0 0
    %736 = vmatpush1.bf16.msra.mxu0 0
    %737 = vmatprep.subr.bf16.mxu0 0
    %738 = vmatpush1.bf16.msra.mxu0 0
    %739 = vmatprep.subr.bf16.mxu0 0
    %740 = vmatpush1.bf16.msra.mxu0 0
    %741 = vmatprep.subr.bf16.mxu0 0
    %742 = vmatpush1.bf16.msra.mxu0 %v226
    %743 = vmatprep.subr.bf16.mxu0 0
    %744 = vmatpush2.bf16.msra.mxu0 0
    %745 = vmatprep.subr.bf16.mxu0 0
    %746 = vmatpush2.bf16.msra.mxu0 0
    %747 = vmatprep.subr.bf16.mxu0 0
    %748 = vmatpush2.bf16.msra.mxu0 0
    %749 = vmatprep.subr.bf16.mxu0 0
    %750 = vmatpush2.bf16.msra.mxu0 0
    %751 = vmatprep.subr.bf16.mxu0 0
    %752 = vmatpush2.bf16.msra.mxu0 0
    %753 = vmatprep.subr.bf16.mxu0 0
    %754 = vmatpush2.bf16.msra.mxu0 0
    %755 = vmatprep.subr.bf16.mxu0 0
    %756 = vmatpush2.bf16.msra.mxu0 0
    %757 = vmatprep.subr.bf16.mxu0 0
    %758 = vmatpush2.bf16.msra.mxu0 0
    %759 = vmatprep.mubr.bf16.mxu0 0
    %760 = vmatmul.mubr.bf16.gmra.mxu0 %v725
    %v761 = vpop.f32.mrf.mxu0
    %v762 = vadd.f32 0.0, %v761
    %v763 = vpop.f32.mrf.mxu0
    %v764 = vpop.f32.mrf.mxu0
    %v765 = vpop.f32.mrf.mxu0
    %766 = vdwg.mxu0
    %v767 = vmul.f32 %v610, 0.5
    %v768 = vadd.f32 %v767, %v203
    %v769 = vmul.f32 %v613, 0.75
    %v770 = vadd.f32 %v769, %v768
    %v771 = vsel %vm614, %v768, %v770
    %vm772 = vcmp.gt.f32.partialorder %v771, 0.5
    %v773 = vsel %vm772, 1, 0
    %v774 = vcvt.s32.f32 %v773
    %v775 = vpack.c.bf16 %v774, %v774
    %v777 = vsel %vm144, %v775, 0
    %779 = vmatprep.subr.bf16.mxu0 0
    %780 = vmatpush1.bf16.msra.mxu0 0
    %781 = vmatprep.subr.bf16.mxu0 0
    %782 = vmatpush1.bf16.msra.mxu0 0
    %783 = vmatprep.subr.bf16.mxu0 0
    %784 = vmatpush1.bf16.msra.mxu0 0
    %785 = vmatprep.subr.bf16.mxu0 0
    %786 = vmatpush1.bf16.msra.mxu0 0
    %787 = vmatprep.subr.bf16.mxu0 0
    %788 = vmatpush1.bf16.msra.mxu0 0
    %789 = vmatprep.subr.bf16.mxu0 0
    %790 = vmatpush1.bf16.msra.mxu0 0
    %791 = vmatprep.subr.bf16.mxu0 0
    %792 = vmatpush1.bf16.msra.mxu0 %v287
    %793 = vmatprep.subr.bf16.mxu0 0
    %794 = vmatpush1.bf16.msra.mxu0 %v286
    %795 = vmatprep.subr.bf16.mxu0 0
    %796 = vmatpush2.bf16.msra.mxu0 0
    %797 = vmatprep.subr.bf16.mxu0 0
    %798 = vmatpush2.bf16.msra.mxu0 0
    %799 = vmatprep.subr.bf16.mxu0 0
    %800 = vmatpush2.bf16.msra.mxu0 0
    %801 = vmatprep.subr.bf16.mxu0 0
    %802 = vmatpush2.bf16.msra.mxu0 0
    %803 = vmatprep.subr.bf16.mxu0 0
    %804 = vmatpush2.bf16.msra.mxu0 0
    %805 = vmatprep.subr.bf16.mxu0 0
    %806 = vmatpush2.bf16.msra.mxu0 0
    %807 = vmatprep.subr.bf16.mxu0 0
    %808 = vmatpush2.bf16.msra.mxu0 0
    %809 = vmatprep.subr.bf16.mxu0 0
    %810 = vmatpush2.bf16.msra.mxu0 0
    %811 = vmatprep.mubr.bf16.mxu0 0
    %812 = vmatmul.mubr.bf16.gmra.mxu0 %v777
    %v813 = vpop.f32.mrf.mxu0
    %v814 = vadd.f32 %v291, %v813
    %v815 = vpop.f32.mrf.mxu0
    %v816 = vpop.f32.mrf.mxu0
    %v817 = vpop.f32.mrf.mxu0
    %818 = vdwg.mxu0
    %v819 = vmul.f32 %v662, 0.5
    %v820 = vadd.f32 %v819, %v814
    %v821 = vmul.f32 %v665, 0.75
    %v822 = vadd.f32 %v821, %v820
    %v823 = vsel %vm666, %v820, %v822
    %vm824 = vcmp.gt.f32.partialorder %v823, 0.5
    %v825 = vsel %vm824, 1, 0
    %v826 = vcvt.s32.f32 %v825
    %v827 = vpack.c.bf16 %v826, %v826
    %v829 = vsel %vm144, %v827, 0
    %831 = vmatprep.subr.bf16.mxu0 0
    %832 = vmatpush1.bf16.msra.mxu0 0
    %833 = vmatprep.subr.bf16.mxu0 0
    %834 = vmatpush1.bf16.msra.mxu0 0
    %835 = vmatprep.subr.bf16.mxu0 0
    %836 = vmatpush1.bf16.msra.mxu0 0
    %837 = vmatprep.subr.bf16.mxu0 0
    %838 = vmatpush1.bf16.msra.mxu0 0
    %839 = vmatprep.subr.bf16.mxu0 0
    %840 = vmatpush1.bf16.msra.mxu0 0
    %841 = vmatprep.subr.bf16.mxu0 0
    %842 = vmatpush1.bf16.msra.mxu0 0
    %843 = vmatprep.subr.bf16.mxu0 0
    %844 = vmatpush1.bf16.msra.mxu0 %v351
    %845 = vmatprep.subr.bf16.mxu0 0
    %846 = vmatpush1.bf16.msra.mxu0 %v350
    %847 = vmatprep.subr.bf16.mxu0 0
    %848 = vmatpush2.bf16.msra.mxu0 0
    %849 = vmatprep.subr.bf16.mxu0 0
    %850 = vmatpush2.bf16.msra.mxu0 0
    %851 = vmatprep.subr.bf16.mxu0 0
    %852 = vmatpush2.bf16.msra.mxu0 0
    %853 = vmatprep.subr.bf16.mxu0 0
    %854 = vmatpush2.bf16.msra.mxu0 0
    %855 = vmatprep.subr.bf16.mxu0 0
    %856 = vmatpush2.bf16.msra.mxu0 0
    %857 = vmatprep.subr.bf16.mxu0 0
    %858 = vmatpush2.bf16.msra.mxu0 0
    %859 = vmatprep.subr.bf16.mxu0 0
    %860 = vmatpush2.bf16.msra.mxu0 0
    %861 = vmatprep.subr.bf16.mxu0 0
    %862 = vmatpush2.bf16.msra.mxu0 0
    %863 = vmatprep.mubr.bf16.mxu0 0
    %864 = vmatmul.mubr.bf16.gmra.mxu0 %v829
    %v865 = vpop.f32.mrf.mxu0
    %v866 = vadd.f32 %v762, %v865
    %v867 = vpop.f32.mrf.mxu0
    %v868 = vpop.f32.mrf.mxu0
    %v869 = vpop.f32.mrf.mxu0
    %870 = vdwg.mxu0
    %v871 = vadd.f32 %v866, %v398
    %v872 = vmul.f32 %v715, 0.5
    %v873 = vadd.f32 %v872, %v871
    %v874 = vmul.f32 %v718, 0.75
    %v875 = vadd.f32 %v874, %v873
    %v876 = vsel %vm719, %v873, %v875
    %vm877 = vcmp.gt.f32.partialorder %v876, 0.5
    %v878 = vsel %vm877, 1, 0
    %v879 = vcvt.s32.f32 %v878
    %v880 = vpack.c.bf16 %v879, %v879
    %v881 = vadd.f32 %v723, %v879
    %v883 = vsel %vm228, %v880, 0
    %885 = vmatprep.subr.bf16.mxu0 0
    %886 = vmatpush1.bf16.msra.mxu0 0
    %887 = vmatprep.subr.bf16.mxu0 0
    %888 = vmatpush1.bf16.msra.mxu0 0
    %889 = vmatprep.subr.bf16.mxu0 0
    %890 = vmatpush1.bf16.msra.mxu0 0
    %891 = vmatprep.subr.bf16.mxu0 0
    %892 = vmatpush1.bf16.msra.mxu0 0
    %893 = vmatprep.subr.bf16.mxu0 0
    %894 = vmatpush1.bf16.msra.mxu0 0
    %895 = vmatprep.subr.bf16.mxu0 0
    %896 = vmatpush1.bf16.msra.mxu0 0
    %897 = vmatprep.subr.bf16.mxu0 0
    %898 = vmatpush1.bf16.msra.mxu0 0
    %899 = vmatprep.subr.bf16.mxu0 0
    %900 = vmatpush1.bf16.msra.mxu0 %v226
    %901 = vmatprep.subr.bf16.mxu0 0
    %902 = vmatpush2.bf16.msra.mxu0 0
    %903 = vmatprep.subr.bf16.mxu0 0
    %904 = vmatpush2.bf16.msra.mxu0 0
    %905 = vmatprep.subr.bf16.mxu0 0
    %906 = vmatpush2.bf16.msra.mxu0 0
    %907 = vmatprep.subr.bf16.mxu0 0
    %908 = vmatpush2.bf16.msra.mxu0 0
    %909 = vmatprep.subr.bf16.mxu0 0
    %910 = vmatpush2.bf16.msra.mxu0 0
    %911 = vmatprep.subr.bf16.mxu0 0
    %912 = vmatpush2.bf16.msra.mxu0 0
    %913 = vmatprep.subr.bf16.mxu0 0
    %914 = vmatpush2.bf16.msra.mxu0 0
    %915 = vmatprep.subr.bf16.mxu0 0
    %916 = vmatpush2.bf16.msra.mxu0 0
    %917 = vmatprep.mubr.bf16.mxu0 0
    %918 = vmatmul.mubr.bf16.gmra.mxu0 %v883
    %v919 = vpop.f32.mrf.mxu0
    %v920 = vadd.f32 0.0, %v919
    %v921 = vpop.f32.mrf.mxu0
    %v922 = vpop.f32.mrf.mxu0
    %v923 = vpop.f32.mrf.mxu0
    %924 = vdwg.mxu0
    %v925 = vmul.f32 %v768, 0.5
    %v926 = vadd.f32 %v925, %v208
    %v927 = vmul.f32 %v771, 0.75
    %v928 = vadd.f32 %v927, %v926
    %v929 = vsel %vm772, %v926, %v928
    %vm930 = vcmp.gt.f32.partialorder %v929, 0.5
    %v931 = vsel %vm930, 1, 0
    %v932 = vcvt.s32.f32 %v931
    %v933 = vpack.c.bf16 %v932, %v932
    %v935 = vsel %vm144, %v933, 0
    %937 = vmatprep.subr.bf16.mxu0 0
    %938 = vmatpush1.bf16.msra.mxu0 0
    %939 = vmatprep.subr.bf16.mxu0 0
    %940 = vmatpush1.bf16.msra.mxu0 0
    %941 = vmatprep.subr.bf16.mxu0 0
    %942 = vmatpush1.bf16.msra.mxu0 0
    %943 = vmatprep.subr.bf16.mxu0 0
    %944 = vmatpush1.bf16.msra.mxu0 0
    %945 = vmatprep.subr.bf16.mxu0 0
    %946 = vmatpush1.bf16.msra.mxu0 0
    %947 = vmatprep.subr.bf16.mxu0 0
    %948 = vmatpush1.bf16.msra.mxu0 0
    %949 = vmatprep.subr.bf16.mxu0 0
    %950 = vmatpush1.bf16.msra.mxu0 %v287
    %951 = vmatprep.subr.bf16.mxu0 0
    %952 = vmatpush1.bf16.msra.mxu0 %v286
    %953 = vmatprep.subr.bf16.mxu0 0
    %954 = vmatpush2.bf16.msra.mxu0 0
    %955 = vmatprep.subr.bf16.mxu0 0
    %956 = vmatpush2.bf16.msra.mxu0 0
    %957 = vmatprep.subr.bf16.mxu0 0
    %958 = vmatpush2.bf16.msra.mxu0 0
    %959 = vmatprep.subr.bf16.mxu0 0
    %960 = vmatpush2.bf16.msra.mxu0 0
    %961 = vmatprep.subr.bf16.mxu0 0
    %962 = vmatpush2.bf16.msra.mxu0 0
    %963 = vmatprep.subr.bf16.mxu0 0
    %964 = vmatpush2.bf16.msra.mxu0 0
    %965 = vmatprep.subr.bf16.mxu0 0
    %966 = vmatpush2.bf16.msra.mxu0 0
    %967 = vmatprep.subr.bf16.mxu0 0
    %968 = vmatpush2.bf16.msra.mxu0 0
    %969 = vmatprep.mubr.bf16.mxu0 0
    %970 = vmatmul.mubr.bf16.gmra.mxu0 %v935
    %v971 = vpop.f32.mrf.mxu0
    %v972 = vadd.f32 %v291, %v971
    %v973 = vpop.f32.mrf.mxu0
    %v974 = vpop.f32.mrf.mxu0
    %v975 = vpop.f32.mrf.mxu0
    %976 = vdwg.mxu0
    %v977 = vmul.f32 %v820, 0.5
    %v978 = vadd.f32 %v977, %v972
    %v979 = vmul.f32 %v823, 0.75
    %v980 = vadd.f32 %v979, %v978
    %v981 = vsel %vm824, %v978, %v980
    %vm982 = vcmp.gt.f32.partialorder %v981, 0.5
    %v983 = vsel %vm982, 1, 0
    %v984 = vcvt.s32.f32 %v983
    %v985 = vpack.c.bf16 %v984, %v984
    %v987 = vsel %vm144, %v985, 0
    %989 = vmatprep.subr.bf16.mxu0 0
    %990 = vmatpush1.bf16.msra.mxu0 0
    %991 = vmatprep.subr.bf16.mxu0 0
    %992 = vmatpush1.bf16.msra.mxu0 0
    %993 = vmatprep.subr.bf16.mxu0 0
    %994 = vmatpush1.bf16.msra.mxu0 0
    %995 = vmatprep.subr.bf16.mxu0 0
    %996 = vmatpush1.bf16.msra.mxu0 0
    %997 = vmatprep.subr.bf16.mxu0 0
    %998 = vmatpush1.bf16.msra.mxu0 0
    %999 = vmatprep.subr.bf16.mxu0 0
    %1000 = vmatpush1.bf16.msra.mxu0 0
    %1001 = vmatprep.subr.bf16.mxu0 0
    %1002 = vmatpush1.bf16.msra.mxu0 %v351
    %1003 = vmatprep.subr.bf16.mxu0 0
    %1004 = vmatpush1.bf16.msra.mxu0 %v350
    %1005 = vmatprep.subr.bf16.mxu0 0
    %1006 = vmatpush2.bf16.msra.mxu0 0
    %1007 = vmatprep.subr.bf16.mxu0 0
    %1008 = vmatpush2.bf16.msra.mxu0 0
    %1009 = vmatprep.subr.bf16.mxu0 0
    %1010 = vmatpush2.bf16.msra.mxu0 0
    %1011 = vmatprep.subr.bf16.mxu0 0
    %1012 = vmatpush2.bf16.msra.mxu0 0
    %1013 = vmatprep.subr.bf16.mxu0 0
    %1014 = vmatpush2.bf16.msra.mxu0 0
    %1015 = vmatprep.subr.bf16.mxu0 0
    %1016 = vmatpush2.bf16.msra.mxu0 0
    %1017 = vmatprep.subr.bf16.mxu0 0
    %1018 = vmatpush2.bf16.msra.mxu0 0
    %1019 = vmatprep.subr.bf16.mxu0 0
    %1020 = vmatpush2.bf16.msra.mxu0 0
    %1021 = vmatprep.mubr.bf16.mxu0 0
    %1022 = vmatmul.mubr.bf16.gmra.mxu0 %v987
    %v1023 = vpop.f32.mrf.mxu0
    %v1024 = vadd.f32 %v920, %v1023
    %v1025 = vpop.f32.mrf.mxu0
    %v1026 = vpop.f32.mrf.mxu0
    %v1027 = vpop.f32.mrf.mxu0
    %1028 = vdwg.mxu0
    %v1029 = vadd.f32 %v1024, %v398
    %v1030 = vmul.f32 %v873, 0.5
    %v1031 = vadd.f32 %v1030, %v1029
    %v1032 = vmul.f32 %v876, 0.75
    %v1033 = vadd.f32 %v1032, %v1031
    %v1034 = vsel %vm877, %v1031, %v1033
    %vm1035 = vcmp.gt.f32.partialorder %v1034, 0.5
    %v1036 = vsel %vm1035, 1, 0
    %v1037 = vcvt.s32.f32 %v1036
    %v1038 = vpack.c.bf16 %v1037, %v1037
    %v1039 = vadd.f32 %v881, %v1037
    %v1041 = vsel %vm228, %v1038, 0
    %1043 = vmatprep.subr.bf16.mxu0 0
    %1044 = vmatpush1.bf16.msra.mxu0 0
    %1045 = vmatprep.subr.bf16.mxu0 0
    %1046 = vmatpush1.bf16.msra.mxu0 0
    %1047 = vmatprep.subr.bf16.mxu0 0
    %1048 = vmatpush1.bf16.msra.mxu0 0
    %1049 = vmatprep.subr.bf16.mxu0 0
    %1050 = vmatpush1.bf16.msra.mxu0 0
    %1051 = vmatprep.subr.bf16.mxu0 0
    %1052 = vmatpush1.bf16.msra.mxu0 0
    %1053 = vmatprep.subr.bf16.mxu0 0
    %1054 = vmatpush1.bf16.msra.mxu0 0
    %1055 = vmatprep.subr.bf16.mxu0 0
    %1056 = vmatpush1.bf16.msra.mxu0 0
    %1057 = vmatprep.subr.bf16.mxu0 0
    %1058 = vmatpush1.bf16.msra.mxu0 %v226
    %1059 = vmatprep.subr.bf16.mxu0 0
    %1060 = vmatpush2.bf16.msra.mxu0 0
    %1061 = vmatprep.subr.bf16.mxu0 0
    %1062 = vmatpush2.bf16.msra.mxu0 0
    %1063 = vmatprep.subr.bf16.mxu0 0
    %1064 = vmatpush2.bf16.msra.mxu0 0
    %1065 = vmatprep.subr.bf16.mxu0 0
    %1066 = vmatpush2.bf16.msra.mxu0 0
    %1067 = vmatprep.subr.bf16.mxu0 0
    %1068 = vmatpush2.bf16.msra.mxu0 0
    %1069 = vmatprep.subr.bf16.mxu0 0
    %1070 = vmatpush2.bf16.msra.mxu0 0
    %1071 = vmatprep.subr.bf16.mxu0 0
    %1072 = vmatpush2.bf16.msra.mxu0 0
    %1073 = vmatprep.subr.bf16.mxu0 0
    %1074 = vmatpush2.bf16.msra.mxu0 0
    %1075 = vmatprep.mubr.bf16.mxu0 0
    %1076 = vmatmul.mubr.bf16.gmra.mxu0 %v1041
    %v1077 = vpop.f32.mrf.mxu0
    %v1078 = vadd.f32 0.0, %v1077
    %v1079 = vpop.f32.mrf.mxu0
    %v1080 = vpop.f32.mrf.mxu0
    %v1081 = vpop.f32.mrf.mxu0
    %1082 = vdwg.mxu0
    %v1083 = vmul.f32 %v926, 0.5
    %v1084 = vadd.f32 %v1083, %v211
    %v1085 = vmul.f32 %v929, 0.75
    %v1086 = vadd.f32 %v1085, %v1084
    %v1087 = vsel %vm930, %v1084, %v1086
    %vm1088 = vcmp.gt.f32.partialorder %v1087, 0.5
    %v1089 = vsel %vm1088, 1, 0
    %v1090 = vcvt.s32.f32 %v1089
    %v1091 = vpack.c.bf16 %v1090, %v1090
    %v1093 = vsel %vm144, %v1091, 0
    %1095 = vmatprep.subr.bf16.mxu0 0
    %1096 = vmatpush1.bf16.msra.mxu0 0
    %1097 = vmatprep.subr.bf16.mxu0 0
    %1098 = vmatpush1.bf16.msra.mxu0 0
    %1099 = vmatprep.subr.bf16.mxu0 0
    %1100 = vmatpush1.bf16.msra.mxu0 0
    %1101 = vmatprep.subr.bf16.mxu0 0
    %1102 = vmatpush1.bf16.msra.mxu0 0
    %1103 = vmatprep.subr.bf16.mxu0 0
    %1104 = vmatpush1.bf16.msra.mxu0 0
    %1105 = vmatprep.subr.bf16.mxu0 0
    %1106 = vmatpush1.bf16.msra.mxu0 0
    %1107 = vmatprep.subr.bf16.mxu0 0
    %1108 = vmatpush1.bf16.msra.mxu0 %v287
    %1109 = vmatprep.subr.bf16.mxu0 0
    %1110 = vmatpush1.bf16.msra.mxu0 %v286
    %1111 = vmatprep.subr.bf16.mxu0 0
    %1112 = vmatpush2.bf16.msra.mxu0 0
    %1113 = vmatprep.subr.bf16.mxu0 0
    %1114 = vmatpush2.bf16.msra.mxu0 0
    %1115 = vmatprep.subr.bf16.mxu0 0
    %1116 = vmatpush2.bf16.msra.mxu0 0
    %1117 = vmatprep.subr.bf16.mxu0 0
    %1118 = vmatpush2.bf16.msra.mxu0 0
    %1119 = vmatprep.subr.bf16.mxu0 0
    %1120 = vmatpush2.bf16.msra.mxu0 0
    %1121 = vmatprep.subr.bf16.mxu0 0
    %1122 = vmatpush2.bf16.msra.mxu0 0
    %1123 = vmatprep.subr.bf16.mxu0 0
    %1124 = vmatpush2.bf16.msra.mxu0 0
    %1125 = vmatprep.subr.bf16.mxu0 0
    %1126 = vmatpush2.bf16.msra.mxu0 0
    %1127 = vmatprep.mubr.bf16.mxu0 0
    %1128 = vmatmul.mubr.bf16.gmra.mxu0 %v1093
    %v1129 = vpop.f32.mrf.mxu0
    %v1130 = vadd.f32 %v291, %v1129
    %v1131 = vpop.f32.mrf.mxu0
    %v1132 = vpop.f32.mrf.mxu0
    %v1133 = vpop.f32.mrf.mxu0
    %1134 = vdwg.mxu0
    %v1135 = vmul.f32 %v978, 0.5
    %v1136 = vadd.f32 %v1135, %v1130
    %v1137 = vmul.f32 %v981, 0.75
    %v1138 = vadd.f32 %v1137, %v1136
    %v1139 = vsel %vm982, %v1136, %v1138
    %vm1140 = vcmp.gt.f32.partialorder %v1139, 0.5
    %v1141 = vsel %vm1140, 1, 0
    %v1142 = vcvt.s32.f32 %v1141
    %v1143 = vpack.c.bf16 %v1142, %v1142
    %v1145 = vsel %vm144, %v1143, 0
    %1147 = vmatprep.subr.bf16.mxu0 0
    %1148 = vmatpush1.bf16.msra.mxu0 0
    %1149 = vmatprep.subr.bf16.mxu0 0
    %1150 = vmatpush1.bf16.msra.mxu0 0
    %1151 = vmatprep.subr.bf16.mxu0 0
    %1152 = vmatpush1.bf16.msra.mxu0 0
    %1153 = vmatprep.subr.bf16.mxu0 0
    %1154 = vmatpush1.bf16.msra.mxu0 0
    %1155 = vmatprep.subr.bf16.mxu0 0
    %1156 = vmatpush1.bf16.msra.mxu0 0
    %1157 = vmatprep.subr.bf16.mxu0 0
    %1158 = vmatpush1.bf16.msra.mxu0 0
    %1159 = vmatprep.subr.bf16.mxu0 0
    %1160 = vmatpush1.bf16.msra.mxu0 %v351
    %1161 = vmatprep.subr.bf16.mxu0 0
    %1162 = vmatpush1.bf16.msra.mxu0 %v350
    %1163 = vmatprep.subr.bf16.mxu0 0
    %1164 = vmatpush2.bf16.msra.mxu0 0
    %1165 = vmatprep.subr.bf16.mxu0 0
    %1166 = vmatpush2.bf16.msra.mxu0 0
    %1167 = vmatprep.subr.bf16.mxu0 0
    %1168 = vmatpush2.bf16.msra.mxu0 0
    %1169 = vmatprep.subr.bf16.mxu0 0
    %1170 = vmatpush2.bf16.msra.mxu0 0
    %1171 = vmatprep.subr.bf16.mxu0 0
    %1172 = vmatpush2.bf16.msra.mxu0 0
    %1173 = vmatprep.subr.bf16.mxu0 0
    %1174 = vmatpush2.bf16.msra.mxu0 0
    %1175 = vmatprep.subr.bf16.mxu0 0
    %1176 = vmatpush2.bf16.msra.mxu0 0
    %1177 = vmatprep.subr.bf16.mxu0 0
    %1178 = vmatpush2.bf16.msra.mxu0 0
    %1179 = vmatprep.mubr.bf16.mxu0 0
    %1180 = vmatmul.mubr.bf16.gmra.mxu0 %v1145
    %v1181 = vpop.f32.mrf.mxu0
    %v1182 = vadd.f32 %v1078, %v1181
    %v1183 = vpop.f32.mrf.mxu0
    %v1184 = vpop.f32.mrf.mxu0
    %v1185 = vpop.f32.mrf.mxu0
    %1186 = vdwg.mxu0
    %v1187 = vadd.f32 %v1182, %v398
    %v1188 = vmul.f32 %v1031, 0.5
    %v1189 = vadd.f32 %v1188, %v1187
    %v1190 = vmul.f32 %v1034, 0.75
    %v1191 = vadd.f32 %v1190, %v1189
    %v1192 = vsel %vm1035, %v1189, %v1191
    %vm1193 = vcmp.gt.f32.partialorder %v1192, 0.5
    %v1194 = vsel %vm1193, 1, 0
    %v1195 = vcvt.s32.f32 %v1194
    %v1196 = vpack.c.bf16 %v1195, %v1195
    %v1197 = vadd.f32 %v1039, %v1195
    %v1199 = vsel %vm228, %v1196, 0
    %1201 = vmatprep.subr.bf16.mxu0 0
    %1202 = vmatpush1.bf16.msra.mxu0 0
    %1203 = vmatprep.subr.bf16.mxu0 0
    %1204 = vmatpush1.bf16.msra.mxu0 0
    %1205 = vmatprep.subr.bf16.mxu0 0
    %1206 = vmatpush1.bf16.msra.mxu0 0
    %1207 = vmatprep.subr.bf16.mxu0 0
    %1208 = vmatpush1.bf16.msra.mxu0 0
    %1209 = vmatprep.subr.bf16.mxu0 0
    %1210 = vmatpush1.bf16.msra.mxu0 0
    %1211 = vmatprep.subr.bf16.mxu0 0
    %1212 = vmatpush1.bf16.msra.mxu0 0
    %1213 = vmatprep.subr.bf16.mxu0 0
    %1214 = vmatpush1.bf16.msra.mxu0 0
    %1215 = vmatprep.subr.bf16.mxu0 0
    %1216 = vmatpush1.bf16.msra.mxu0 %v226
    %1217 = vmatprep.subr.bf16.mxu0 0
    %1218 = vmatpush2.bf16.msra.mxu0 0
    %1219 = vmatprep.subr.bf16.mxu0 0
    %1220 = vmatpush2.bf16.msra.mxu0 0
    %1221 = vmatprep.subr.bf16.mxu0 0
    %1222 = vmatpush2.bf16.msra.mxu0 0
    %1223 = vmatprep.subr.bf16.mxu0 0
    %1224 = vmatpush2.bf16.msra.mxu0 0
    %1225 = vmatprep.subr.bf16.mxu0 0
    %1226 = vmatpush2.bf16.msra.mxu0 0
    %1227 = vmatprep.subr.bf16.mxu0 0
    %1228 = vmatpush2.bf16.msra.mxu0 0
    %1229 = vmatprep.subr.bf16.mxu0 0
    %1230 = vmatpush2.bf16.msra.mxu0 0
    %1231 = vmatprep.subr.bf16.mxu0 0
    %1232 = vmatpush2.bf16.msra.mxu0 0
    %1233 = vmatprep.mubr.bf16.mxu0 0
    %1234 = vmatmul.mubr.bf16.gmra.mxu0 %v1199
    %v1235 = vpop.f32.mrf.mxu0
    %v1236 = vadd.f32 0.0, %v1235
    %v1237 = vpop.f32.mrf.mxu0
    %v1238 = vpop.f32.mrf.mxu0
    %v1239 = vpop.f32.mrf.mxu0
    %1240 = vdwg.mxu0
    %v1241 = vmul.f32 %v1084, 0.5
    %v1242 = vadd.f32 %v1241, %v216
    %v1243 = vmul.f32 %v1087, 0.75
    %v1244 = vadd.f32 %v1243, %v1242
    %v1245 = vsel %vm1088, %v1242, %v1244
    %vm1246 = vcmp.gt.f32.partialorder %v1245, 0.5
    %v1247 = vsel %vm1246, 1, 0
    %v1248 = vcvt.s32.f32 %v1247
    %v1249 = vpack.c.bf16 %v1248, %v1248
    %v1251 = vsel %vm144, %v1249, 0
    %1253 = vmatprep.subr.bf16.mxu0 0
    %1254 = vmatpush1.bf16.msra.mxu0 0
    %1255 = vmatprep.subr.bf16.mxu0 0
    %1256 = vmatpush1.bf16.msra.mxu0 0
    %1257 = vmatprep.subr.bf16.mxu0 0
    %1258 = vmatpush1.bf16.msra.mxu0 0
    %1259 = vmatprep.subr.bf16.mxu0 0
    %1260 = vmatpush1.bf16.msra.mxu0 0
    %1261 = vmatprep.subr.bf16.mxu0 0
    %1262 = vmatpush1.bf16.msra.mxu0 0
    %1263 = vmatprep.subr.bf16.mxu0 0
    %1264 = vmatpush1.bf16.msra.mxu0 0
    %1265 = vmatprep.subr.bf16.mxu0 0
    %1266 = vmatpush1.bf16.msra.mxu0 %v287
    %1267 = vmatprep.subr.bf16.mxu0 0
    %1268 = vmatpush1.bf16.msra.mxu0 %v286
    %1269 = vmatprep.subr.bf16.mxu0 0
    %1270 = vmatpush2.bf16.msra.mxu0 0
    %1271 = vmatprep.subr.bf16.mxu0 0
    %1272 = vmatpush2.bf16.msra.mxu0 0
    %1273 = vmatprep.subr.bf16.mxu0 0
    %1274 = vmatpush2.bf16.msra.mxu0 0
    %1275 = vmatprep.subr.bf16.mxu0 0
    %1276 = vmatpush2.bf16.msra.mxu0 0
    %1277 = vmatprep.subr.bf16.mxu0 0
    %1278 = vmatpush2.bf16.msra.mxu0 0
    %1279 = vmatprep.subr.bf16.mxu0 0
    %1280 = vmatpush2.bf16.msra.mxu0 0
    %1281 = vmatprep.subr.bf16.mxu0 0
    %1282 = vmatpush2.bf16.msra.mxu0 0
    %1283 = vmatprep.subr.bf16.mxu0 0
    %1284 = vmatpush2.bf16.msra.mxu0 0
    %1285 = vmatprep.mubr.bf16.mxu0 0
    %1286 = vmatmul.mubr.bf16.gmra.mxu0 %v1251
    %v1287 = vpop.f32.mrf.mxu0
    %v1288 = vadd.f32 %v291, %v1287
    %v1289 = vpop.f32.mrf.mxu0
    %v1290 = vpop.f32.mrf.mxu0
    %v1291 = vpop.f32.mrf.mxu0
    %1292 = vdwg.mxu0
    %v1293 = vmul.f32 %v1136, 0.5
    %v1294 = vadd.f32 %v1293, %v1288
    %v1295 = vmul.f32 %v1139, 0.75
    %v1296 = vadd.f32 %v1295, %v1294
    %v1297 = vsel %vm1140, %v1294, %v1296
    %vm1298 = vcmp.gt.f32.partialorder %v1297, 0.5
    %v1299 = vsel %vm1298, 1, 0
    %v1300 = vcvt.s32.f32 %v1299
    %v1301 = vpack.c.bf16 %v1300, %v1300
    %v1303 = vsel %vm144, %v1301, 0
    %1305 = vmatprep.subr.bf16.mxu0 0
    %1306 = vmatpush1.bf16.msra.mxu0 0
    %1307 = vmatprep.subr.bf16.mxu0 0
    %1308 = vmatpush1.bf16.msra.mxu0 0
    %1309 = vmatprep.subr.bf16.mxu0 0
    %1310 = vmatpush1.bf16.msra.mxu0 0
    %1311 = vmatprep.subr.bf16.mxu0 0
    %1312 = vmatpush1.bf16.msra.mxu0 0
    %1313 = vmatprep.subr.bf16.mxu0 0
    %1314 = vmatpush1.bf16.msra.mxu0 0
    %1315 = vmatprep.subr.bf16.mxu0 0
    %1316 = vmatpush1.bf16.msra.mxu0 0
    %1317 = vmatprep.subr.bf16.mxu0 0
    %1318 = vmatpush1.bf16.msra.mxu0 %v351
    %1319 = vmatprep.subr.bf16.mxu0 0
    %1320 = vmatpush1.bf16.msra.mxu0 %v350
    %1321 = vmatprep.subr.bf16.mxu0 0
    %1322 = vmatpush2.bf16.msra.mxu0 0
    %1323 = vmatprep.subr.bf16.mxu0 0
    %1324 = vmatpush2.bf16.msra.mxu0 0
    %1325 = vmatprep.subr.bf16.mxu0 0
    %1326 = vmatpush2.bf16.msra.mxu0 0
    %1327 = vmatprep.subr.bf16.mxu0 0
    %1328 = vmatpush2.bf16.msra.mxu0 0
    %1329 = vmatprep.subr.bf16.mxu0 0
    %1330 = vmatpush2.bf16.msra.mxu0 0
    %1331 = vmatprep.subr.bf16.mxu0 0
    %1332 = vmatpush2.bf16.msra.mxu0 0
    %1333 = vmatprep.subr.bf16.mxu0 0
    %1334 = vmatpush2.bf16.msra.mxu0 0
    %1335 = vmatprep.subr.bf16.mxu0 0
    %1336 = vmatpush2.bf16.msra.mxu0 0
    %1337 = vmatprep.mubr.bf16.mxu0 0
    %1338 = vmatmul.mubr.bf16.gmra.mxu0 %v1303
    %v1339 = vpop.f32.mrf.mxu0
    %v1340 = vadd.f32 %v1236, %v1339
    %v1341 = vpop.f32.mrf.mxu0
    %v1342 = vpop.f32.mrf.mxu0
    %v1343 = vpop.f32.mrf.mxu0
    %1344 = vdwg.mxu0
    %v1345 = vadd.f32 %v1340, %v398
    %v1346 = vmul.f32 %v1189, 0.5
    %v1347 = vadd.f32 %v1346, %v1345
    %v1348 = vmul.f32 %v1192, 0.75
    %v1349 = vadd.f32 %v1348, %v1347
    %v1350 = vsel %vm1193, %v1347, %v1349
    %vm1351 = vcmp.gt.f32.partialorder %v1350, 0.5
    %v1352 = vsel %vm1351, 1, 0
    %v1353 = vcvt.s32.f32 %v1352
    %v1354 = vpack.c.bf16 %v1353, %v1353
    %v1355 = vadd.f32 %v1197, %v1353
    %v1357 = vsel %vm228, %v1354, 0
    %1359 = vmatprep.subr.bf16.mxu0 0
    %1360 = vmatpush1.bf16.msra.mxu0 0
    %1361 = vmatprep.subr.bf16.mxu0 0
    %1362 = vmatpush1.bf16.msra.mxu0 0
    %1363 = vmatprep.subr.bf16.mxu0 0
    %1364 = vmatpush1.bf16.msra.mxu0 0
    %1365 = vmatprep.subr.bf16.mxu0 0
    %1366 = vmatpush1.bf16.msra.mxu0 0
    %1367 = vmatprep.subr.bf16.mxu0 0
    %1368 = vmatpush1.bf16.msra.mxu0 0
    %1369 = vmatprep.subr.bf16.mxu0 0
    %1370 = vmatpush1.bf16.msra.mxu0 0
    %1371 = vmatprep.subr.bf16.mxu0 0
    %1372 = vmatpush1.bf16.msra.mxu0 0
    %1373 = vmatprep.subr.bf16.mxu0 0
    %1374 = vmatpush1.bf16.msra.mxu0 %v226
    %1375 = vmatprep.subr.bf16.mxu0 0
    %1376 = vmatpush2.bf16.msra.mxu0 0
    %1377 = vmatprep.subr.bf16.mxu0 0
    %1378 = vmatpush2.bf16.msra.mxu0 0
    %1379 = vmatprep.subr.bf16.mxu0 0
    %1380 = vmatpush2.bf16.msra.mxu0 0
    %1381 = vmatprep.subr.bf16.mxu0 0
    %1382 = vmatpush2.bf16.msra.mxu0 0
    %1383 = vmatprep.subr.bf16.mxu0 0
    %1384 = vmatpush2.bf16.msra.mxu0 0
    %1385 = vmatprep.subr.bf16.mxu0 0
    %1386 = vmatpush2.bf16.msra.mxu0 0
    %1387 = vmatprep.subr.bf16.mxu0 0
    %1388 = vmatpush2.bf16.msra.mxu0 0
    %1389 = vmatprep.subr.bf16.mxu0 0
    %1390 = vmatpush2.bf16.msra.mxu0 0
    %1391 = vmatprep.mubr.bf16.mxu0 0
    %1392 = vmatmul.mubr.bf16.gmra.mxu0 %v1357
    %v1393 = vpop.f32.mrf.mxu0
    %v1394 = vadd.f32 0.0, %v1393
    %v1395 = vpop.f32.mrf.mxu0
    %v1396 = vpop.f32.mrf.mxu0
    %v1397 = vpop.f32.mrf.mxu0
    %1398 = vdwg.mxu0
    %v1399 = vmul.f32 %v1242, 0.5
    %v1400 = vadd.f32 %v1399, %v219
    %v1401 = vmul.f32 %v1245, 0.75
    %v1402 = vadd.f32 %v1401, %v1400
    %v1403 = vsel %vm1246, %v1400, %v1402
    %vm1404 = vcmp.gt.f32.partialorder %v1403, 0.5
    %v1405 = vsel %vm1404, 1, 0
    %v1406 = vcvt.s32.f32 %v1405
    %v1407 = vpack.c.bf16 %v1406, %v1406
    %v1409 = vsel %vm144, %v1407, 0
    %1411 = vmatprep.subr.bf16.mxu0 0
    %1412 = vmatpush1.bf16.msra.mxu0 0
    %1413 = vmatprep.subr.bf16.mxu0 0
    %1414 = vmatpush1.bf16.msra.mxu0 0
    %1415 = vmatprep.subr.bf16.mxu0 0
    %1416 = vmatpush1.bf16.msra.mxu0 0
    %1417 = vmatprep.subr.bf16.mxu0 0
    %1418 = vmatpush1.bf16.msra.mxu0 0
    %1419 = vmatprep.subr.bf16.mxu0 0
    %1420 = vmatpush1.bf16.msra.mxu0 0
    %1421 = vmatprep.subr.bf16.mxu0 0
    %1422 = vmatpush1.bf16.msra.mxu0 0
    %1423 = vmatprep.subr.bf16.mxu0 0
    %1424 = vmatpush1.bf16.msra.mxu0 %v287
    %1425 = vmatprep.subr.bf16.mxu0 0
    %1426 = vmatpush1.bf16.msra.mxu0 %v286
    %1427 = vmatprep.subr.bf16.mxu0 0
    %1428 = vmatpush2.bf16.msra.mxu0 0
    %1429 = vmatprep.subr.bf16.mxu0 0
    %1430 = vmatpush2.bf16.msra.mxu0 0
    %1431 = vmatprep.subr.bf16.mxu0 0
    %1432 = vmatpush2.bf16.msra.mxu0 0
    %1433 = vmatprep.subr.bf16.mxu0 0
    %1434 = vmatpush2.bf16.msra.mxu0 0
    %1435 = vmatprep.subr.bf16.mxu0 0
    %1436 = vmatpush2.bf16.msra.mxu0 0
    %1437 = vmatprep.subr.bf16.mxu0 0
    %1438 = vmatpush2.bf16.msra.mxu0 0
    %1439 = vmatprep.subr.bf16.mxu0 0
    %1440 = vmatpush2.bf16.msra.mxu0 0
    %1441 = vmatprep.subr.bf16.mxu0 0
    %1442 = vmatpush2.bf16.msra.mxu0 0
    %1443 = vmatprep.mubr.bf16.mxu0 0
    %1444 = vmatmul.mubr.bf16.gmra.mxu0 %v1409
    %v1445 = vpop.f32.mrf.mxu0
    %v1446 = vadd.f32 %v291, %v1445
    %v1447 = vpop.f32.mrf.mxu0
    %v1448 = vpop.f32.mrf.mxu0
    %v1449 = vpop.f32.mrf.mxu0
    %1450 = vdwg.mxu0
    %v1451 = vmul.f32 %v1294, 0.5
    %v1452 = vadd.f32 %v1451, %v1446
    %v1453 = vmul.f32 %v1297, 0.75
    %v1454 = vadd.f32 %v1453, %v1452
    %v1455 = vsel %vm1298, %v1452, %v1454
    %vm1456 = vcmp.gt.f32.partialorder %v1455, 0.5
    %v1457 = vsel %vm1456, 1, 0
    %v1458 = vcvt.s32.f32 %v1457
    %v1459 = vpack.c.bf16 %v1458, %v1458
    %v1461 = vsel %vm144, %v1459, 0
    %1463 = vmatprep.subr.bf16.mxu0 0
    %1464 = vmatpush1.bf16.msra.mxu0 0
    %1465 = vmatprep.subr.bf16.mxu0 0
    %1466 = vmatpush1.bf16.msra.mxu0 0
    %1467 = vmatprep.subr.bf16.mxu0 0
    %1468 = vmatpush1.bf16.msra.mxu0 0
    %1469 = vmatprep.subr.bf16.mxu0 0
    %1470 = vmatpush1.bf16.msra.mxu0 0
    %1471 = vmatprep.subr.bf16.mxu0 0
    %1472 = vmatpush1.bf16.msra.mxu0 0
    %1473 = vmatprep.subr.bf16.mxu0 0
    %1474 = vmatpush1.bf16.msra.mxu0 0
    %1475 = vmatprep.subr.bf16.mxu0 0
    %1476 = vmatpush1.bf16.msra.mxu0 %v351
    %1477 = vmatprep.subr.bf16.mxu0 0
    %1478 = vmatpush1.bf16.msra.mxu0 %v350
    %1479 = vmatprep.subr.bf16.mxu0 0
    %1480 = vmatpush2.bf16.msra.mxu0 0
    %1481 = vmatprep.subr.bf16.mxu0 0
    %1482 = vmatpush2.bf16.msra.mxu0 0
    %1483 = vmatprep.subr.bf16.mxu0 0
    %1484 = vmatpush2.bf16.msra.mxu0 0
    %1485 = vmatprep.subr.bf16.mxu0 0
    %1486 = vmatpush2.bf16.msra.mxu0 0
    %1487 = vmatprep.subr.bf16.mxu0 0
    %1488 = vmatpush2.bf16.msra.mxu0 0
    %1489 = vmatprep.subr.bf16.mxu0 0
    %1490 = vmatpush2.bf16.msra.mxu0 0
    %1491 = vmatprep.subr.bf16.mxu0 0
    %1492 = vmatpush2.bf16.msra.mxu0 0
    %1493 = vmatprep.subr.bf16.mxu0 0
    %1494 = vmatpush2.bf16.msra.mxu0 0
    %1495 = vmatprep.mubr.bf16.mxu0 0
    %1496 = vmatmul.mubr.bf16.gmra.mxu0 %v1461
    %v1497 = vpop.f32.mrf.mxu0
    %v1498 = vadd.f32 %v1394, %v1497
    %v1499 = vpop.f32.mrf.mxu0
    %v1500 = vpop.f32.mrf.mxu0
    %v1501 = vpop.f32.mrf.mxu0
    %1502 = vdwg.mxu0
    %v1503 = vadd.f32 %v1498, %v398
    %v1504 = vmul.f32 %v1347, 0.5
    %v1505 = vadd.f32 %v1504, %v1503
    %v1506 = vmul.f32 %v1350, 0.75
    %v1507 = vadd.f32 %v1506, %v1505
    %v1508 = vsel %vm1351, %v1505, %v1507
    %vm1509 = vcmp.gt.f32.partialorder %v1508, 0.5
    %v1510 = vsel %vm1509, 1, 0
    %v1511 = vcvt.s32.f32 %v1510
    %v1512 = vadd.f32 %v1355, %v1511
    %v1513 = vmul.f32 %v75, 8.0
    %v1514 = vlaneseq
    %v1515 = vshrl.u32 %v1514, 7
    %v1516 = vsub.s32 0, %v1515
    %v1517 = vrot.slane %v1513, %v1516
    %v1519 = vsel %vm228, %v1512, 0
    %1521 = vmatprep.subr.mxu0 0.0
    %1522 = vmatpush1.msra.mxu0 0.0
    %1523 = vmatprep.subr.mxu0 0.0
    %1524 = vmatpush1.msra.mxu0 0.0
    %1525 = vmatprep.subr.mxu0 0.0
    %1526 = vmatpush1.msra.mxu0 0.0
    %1527 = vmatprep.subr.mxu0 0.0
    %1528 = vmatpush1.msra.mxu0 0.0
    %1529 = vmatprep.subr.mxu0 0.0
    %1530 = vmatpush1.msra.mxu0 0.0
    %1531 = vmatprep.subr.mxu0 0.0
    %1532 = vmatpush1.msra.mxu0 0.0
    %1533 = vmatprep.subr.mxu0 0.0
    %1534 = vmatpush1.msra.mxu0 0.0
    %1535 = vmatprep.subr.mxu0 0.0
    %1536 = vmatpush1.msra.mxu0 0.0
    %1537 = vmatprep.subr.mxu0 0.0
    %1538 = vmatpush1.msra.mxu0 0.0
    %1539 = vmatprep.subr.mxu0 0.0
    %1540 = vmatpush1.msra.mxu0 0.0
    %1541 = vmatprep.subr.mxu0 0.0
    %1542 = vmatpush1.msra.mxu0 0.0
    %1543 = vmatprep.subr.mxu0 0.0
    %1544 = vmatpush1.msra.mxu0 0.0
    %1545 = vmatprep.subr.mxu0 0.0
    %1546 = vmatpush1.msra.mxu0 0.0
    %1547 = vmatprep.subr.mxu0 0.0
    %1548 = vmatpush1.msra.mxu0 0.0
    %1549 = vmatprep.subr.mxu0 0.0
    %1550 = vmatpush1.msra.mxu0 %v74
    %1551 = vmatprep.subr.mxu0 0.0
    %1552 = vmatpush1.msra.mxu0 %v73
    %1553 = vmatprep.subr.mxu0 0.0
    %1554 = vmatpush2.msra.mxu0 0.0
    %1555 = vmatprep.subr.mxu0 0.0
    %1556 = vmatpush2.msra.mxu0 0.0
    %1557 = vmatprep.subr.mxu0 0.0
    %1558 = vmatpush2.msra.mxu0 0.0
    %1559 = vmatprep.subr.mxu0 0.0
    %1560 = vmatpush2.msra.mxu0 0.0
    %1561 = vmatprep.subr.mxu0 0.0
    %1562 = vmatpush2.msra.mxu0 0.0
    %1563 = vmatprep.subr.mxu0 0.0
    %1564 = vmatpush2.msra.mxu0 0.0
    %1565 = vmatprep.subr.mxu0 0.0
    %1566 = vmatpush2.msra.mxu0 0.0
    %1567 = vmatprep.subr.mxu0 0.0
    %1568 = vmatpush2.msra.mxu0 0.0
    %1569 = vmatprep.subr.mxu0 0.0
    %1570 = vmatpush2.msra.mxu0 0.0
    %1571 = vmatprep.subr.mxu0 0.0
    %1572 = vmatpush2.msra.mxu0 0.0
    %1573 = vmatprep.subr.mxu0 0.0
    %1574 = vmatpush2.msra.mxu0 0.0
    %1575 = vmatprep.subr.mxu0 0.0
    %1576 = vmatpush2.msra.mxu0 0.0
    %1577 = vmatprep.subr.mxu0 0.0
    %1578 = vmatpush2.msra.mxu0 0.0
    %1579 = vmatprep.subr.mxu0 0.0
    %1580 = vmatpush2.msra.mxu0 0.0
    %1581 = vmatprep.subr.mxu0 0.0
    %1582 = vmatpush2.msra.mxu0 0.0
    %1583 = vmatprep.subr.mxu0 0.0
    %1584 = vmatpush2.msra.mxu0 0.0
    %1585 = vmatprep.mubr.f32.mxu0 0.0
    %1586 = vmatmul.mubr.f32.gmra.mxu0 %v1519
    %v1587 = vpop.f32.mrf.mxu0
    %v1588 = vadd.f32 %v1517, %v1587
    %v1589 = vpop.f32.mrf.mxu0
    %1590 = vdwg.mxu0
    %v1591 = vtanh.pop %v1588
    %vm1592 = vcmask 31744
    %1593 = vst.msk [vmem:[%s8] sm:$0xff] %vm1592, %v1591
    // Predicated region
    $region38: #{tpu_custom_call.1} parent=1 // pred_check
      _
    $region39: #{tpu_custom_call.1} parent=1 // pred_check_branch
      %1595 = sbr.rel (0) target = $region41
    $region40: #{tpu_custom_call.1} parent=1 // pred_region
      _
    $region41: #{tpu_custom_call.1} parent=1 // pred_fallthru
      _
    // Predicated region
    $region42: #{tpu_custom_call.1} parent=1 // pred_check
      _
    $region43: #{tpu_custom_call.1} parent=1 // pred_check_branch
      %1597 = sbr.rel (0) target = $region45
    $region44: #{tpu_custom_call.1} parent=1 // pred_region
      _
    $region45: #{tpu_custom_call.1} parent=1 // pred_fallthru
      _
    %1598 = vsyncpa [#allocation3], 1

</llo_original>
